<compile_context>
chip_gen: v6e
topology: v6e:2x2x1
jax: 0.10.0
libtpu: 0.0.40
codegen_flags: <defaults>
</compile_context>

<pallas_src>
import functools

import jax
import jax.numpy as jnp
from jax.experimental import pallas as pl
from jax.experimental.pallas import tpu as pltpu

LN_EPS = 1e-6   # the module sets nn.LayerNorm(d_model, eps=1e-06)


def attn_encoder_kernel(tags_ref, emb_ref, wq_ref, wk_ref, wv_ref, wfc_ref,
                        g_ref, b_ref, out_ref, attn_ref,
                        *, n_head, d_k, d_v, blk_b, seq_len):
    """Processes a block of `blk_b` batch elements fully in VMEM/vregs.

    tags_ref: (1, blk_b*L, 1) int32   tag ids (column layout)
    emb_ref:  (V, D)                  embedding table (resident across grid steps)
    wq/wk/wv_ref: (H*dk, D)           nn.Linear weights, PyTorch (out, in) layout
    wfc_ref:  (D, H*dv)               fc weight, (out, in) layout
    g_ref/b_ref: (1, D)               LayerNorm affine params
    out_ref:  (1, blk_b, D)           pooled + LayerNorm'd encodings
    attn_ref: (1, blk_b, L, H*L)      attention probs, heads packed along lanes
    """
    f32 = jnp.float32
    V, D = emb_ref.shape
    R = blk_b * seq_len
    dn_nt = (((1,), (1,)), ((), ()))                 # contract last dims: A @ B^T

    # --- fused embedding gather: exact one-hot @ table matmul -----------------
    tag_col = tags_ref[0]                                           # (R, 1) int32
    onehot = (tag_col == jax.lax.broadcasted_iota(jnp.int32, (R, V), 1)).astype(f32)
    x2 = jnp.dot(onehot, emb_ref[...], preferred_element_type=f32)  # (R, D)

    # --- QKV projections: one (R, D) x (D, H*d) matmul each -------------------
    q = jax.lax.dot_general(x2, wq_ref[...], dn_nt, preferred_element_type=f32)
    k = jax.lax.dot_general(x2, wk_ref[...], dn_nt, preferred_element_type=f32)
    v = jax.lax.dot_general(x2, wv_ref[...], dn_nt, preferred_element_type=f32)
    q = q * (1.0 / float(d_k) ** 0.5)                # scale applied once per block

    o_heads = []        # per-head (blk_b, d_v) token-pooled outputs
    attn_heads = []     # per-head (blk_b, L, L) probabilities
    for h in range(n_head):
        qh = q[:, h * d_k:(h + 1) * d_k].reshape(blk_b, seq_len, d_k)
        kh = k[:, h * d_k:(h + 1) * d_k].reshape(blk_b, seq_len, d_k)
        vh = v[:, h * d_v:(h + 1) * d_v].reshape(blk_b, seq_len, d_v)

        # scores: batched over the block, no transpose materialized.
        s = jax.lax.dot_general(qh, kh, (((2,), (2,)), ((0,), (0,))),
                                preferred_element_type=f32)         # (blk_b, L, L)
        m = jnp.max(s, axis=-1, keepdims=True)
        p = jnp.exp(s - m)
        attn_h = p * pl.reciprocal(jnp.sum(p, axis=-1, keepdims=True))
        # TODO(synk): attention dropout omitted (eval-mode identity).
        attn_heads.append(attn_h)

        oh = jax.lax.dot_general(attn_h, vh, (((2,), (1,)), ((0,), (0,))),
                                 preferred_element_type=f32)        # (blk_b, L, dv)
        # fc-then-sum over tokens == sum-then-fc (fc has no bias) -> pool now.
        o_heads.append(jnp.sum(oh, axis=1))                         # (blk_b, dv)

    # Single lane-dense store of all heads' probabilities for this block.
    attn_ref[0] = jnp.concatenate(attn_heads, axis=-1).astype(attn_ref.dtype)

    # Single fc matmul after the head loop.
    o_sum = jnp.concatenate(o_heads, axis=-1)                       # (blk_b, H*dv)
    y = jax.lax.dot_general(o_sum, wfc_ref[...], dn_nt,
                            preferred_element_type=f32)             # (blk_b, D)
    # TODO(synk): post-fc dropout omitted (eval-mode identity).

    # LayerNorm over d_model (biased variance, eps=1e-6, affine).
    mean = jnp.mean(y, axis=-1, keepdims=True)
    var = jnp.mean(jnp.square(y - mean), axis=-1, keepdims=True)
    y = (y - mean) * jax.lax.rsqrt(var + LN_EPS)
    y = y * g_ref[...] + b_ref[...]
    out_ref[0] = y.astype(out_ref.dtype)


def _choose_blk_b(B, L):
    # Target ~256 rows per grid step so the QKV matmuls give the MXU real row
    # counts, but keep at least two grid blocks when B >= 2 so the "parallel"
    # batch axis can shard across v7x's two TensorCores.
    blk = max(1, min(B, 256 // max(L, 1)))
    if B >= 2:
        blk = min(blk, pl.cdiv(B, 2))
    return blk


def tag_self_attention_forward(tags, emb, wq, wk, wv, wfc, gamma, beta,
                               *, n_head, d_k, d_v):
    """tags: (B, L) int; emb: (V, D); wq/wk/wv: (H*dk, D); wfc: (D, H*dv).

    Weight layouts match PyTorch nn.Linear.weight (out_features, in_features).
    Returns (q, attn) with shapes (B, D) and (B, H, L, L).
    """
    B, L = tags.shape
    V, D = emb.shape

    blk_b = _choose_blk_b(B, L)
    num_blocks = pl.cdiv(B, blk_b)
    B_pad = num_blocks * blk_b

    tags = tags.astype(jnp.int32)
    if B_pad != B:
        tags = jnp.pad(tags, ((0, B_pad - B), (0, 0)))
    tags_col = tags.reshape(num_blocks, blk_b * L, 1)       # column layout for one-hot

    g2 = gamma.reshape(1, D).astype(jnp.float32)
    b2 = beta.reshape(1, D).astype(jnp.float32)

    kernel = functools.partial(attn_encoder_kernel, n_head=n_head, d_k=d_k,
                               d_v=d_v, blk_b=blk_b, seq_len=L)

    out, attn_flat = pl.pallas_call(
        kernel,
        out_shape=(
            jax.ShapeDtypeStruct((num_blocks, blk_b, D), jnp.float32),
            jax.ShapeDtypeStruct((num_blocks, blk_b, L, n_head * L), jnp.float32),
        ),
        grid=(num_blocks,),
        in_specs=[
            pl.BlockSpec((1, blk_b * L, 1), lambda b: (b, 0, 0)),   # tags: one block/step
            pl.BlockSpec((V, D), lambda b: (0, 0)),                 # emb: resident
            pl.BlockSpec((n_head * d_k, D), lambda b: (0, 0)),      # wq: resident
            pl.BlockSpec((n_head * d_k, D), lambda b: (0, 0)),      # wk
            pl.BlockSpec((n_head * d_v, D), lambda b: (0, 0)),      # wv
            pl.BlockSpec((D, n_head * d_v), lambda b: (0, 0)),      # wfc
            pl.BlockSpec((1, D), lambda b: (0, 0)),                 # gamma
            pl.BlockSpec((1, D), lambda b: (0, 0)),                 # beta
        ],
        out_specs=(
            pl.BlockSpec((1, blk_b, D), lambda b: (b, 0, 0)),
            pl.BlockSpec((1, blk_b, L, n_head * L), lambda b: (b, 0, 0, 0)),
        ),
        compiler_params=pltpu.CompilerParams(
            dimension_semantics=("parallel",)),
    )(tags_col, emb.astype(jnp.float32), wq.astype(jnp.float32),
      wk.astype(jnp.float32), wv.astype(jnp.float32), wfc.astype(jnp.float32),
      g2, b2)

    out = out.reshape(B_pad, D)[:B]
    # (nb, blk_b, L, H*L) -> (B, L, H, L) -> (B, H, L, L); tiny reshape/transpose
    # outside the kernel (kernel stores are lane-dense per block).
    attn = attn_flat.reshape(B_pad, L, n_head, L)[:B].transpose(0, 2, 1, 3)
    return out, attn


def ref_forward(tags, emb, wq, wk, wv, wfc, gamma, beta, *, n_head, d_k, d_v):
    """Pure-JAX reference of the PyTorch forward (dropout = identity, mask=None)."""
    x = jnp.take(emb, tags, axis=0).astype(jnp.float32)             # (B, L, D)
    B, L, D = x.shape
    q = (x @ wq.T).reshape(B, L, n_head, d_k).transpose(0, 2, 1, 3)  # (B,H,L,dk)
    k = (x @ wk.T).reshape(B, L, n_head, d_k).transpose(0, 2, 1, 3)
    v = (x @ wv.T).reshape(B, L, n_head, d_v).transpose(0, 2, 1, 3)
    s = jnp.einsum('bhqd,bhkd->bhqk', q / (float(d_k) ** 0.5), k)
    attn = jax.nn.softmax(s, axis=-1)
    o = jnp.einsum('bhqk,bhkd->bhqd', attn, v)                       # (B,H,L,dv)
    o = o.transpose(0, 2, 1, 3).reshape(B, L, n_head * d_v)
    y = (o @ wfc.T).sum(axis=1)                                      # (B, D)
    mean = y.mean(axis=-1, keepdims=True)
    var = jnp.mean(jnp.square(y - mean), axis=-1, keepdims=True)
    y = (y - mean) * jax.lax.rsqrt(var + LN_EPS)
    y = y * gamma + beta
    return y, attn


if __name__ == "__main__":
    # Small shapes consistent with the module.
    B, L = 2, 8                    # batch, number of tags (sequence length)
    V = 16                         # max_num_tags (vocab of the embedding table)
    D_MODEL = 32                   # d_model (== embedding dim from emb_file)
    N_HEAD, D_K, D_V = 4, 8, 8

    key = jax.random.PRNGKey(0)
    k_tags, k_emb, k_q, k_k, k_v, k_fc = jax.random.split(key, 6)

    tags = jax.random.randint(k_tags, (B, L), 0, V, dtype=jnp.int32)
    emb = jax.random.normal(k_emb, (V, D_MODEL), jnp.float32)         # pretrained table stand-in
    # PyTorch nn.Linear(..., bias=False) weights: (out_features, in_features).
    scale = 1.0 / (D_MODEL ** 0.5)
    wq = jax.random.normal(k_q, (N_HEAD * D_K, D_MODEL), jnp.float32) * scale
    wk = jax.random.normal(k_k, (N_HEAD * D_K, D_MODEL), jnp.float32) * scale
    wv = jax.random.normal(k_v, (N_HEAD * D_V, D_MODEL), jnp.float32) * scale
    wfc = jax.random.normal(k_fc, (D_MODEL, N_HEAD * D_V), jnp.float32) * scale
    gamma = jnp.ones((D_MODEL,), jnp.float32)                         # LayerNorm.weight default
    beta = jnp.zeros((D_MODEL,), jnp.float32)                         # LayerNorm.bias default

    fwd = jax.jit(functools.partial(tag_self_attention_forward,
                                    n_head=N_HEAD, d_k=D_K, d_v=D_V))
    out, attn = fwd(tags, emb, wq, wk, wv, wfc, gamma, beta)
    out = jax.block_until_ready(out)
    attn = jax.block_until_ready(attn)

    with jax.default_matmul_precision("highest"):
        ref_out, ref_attn = ref_forward(tags, emb, wq, wk, wv, wfc, gamma, beta,
                                        n_head=N_HEAD, d_k=D_K, d_v=D_V)

    assert out.shape == (B, D_MODEL), out.shape
    assert attn.shape == (B, N_HEAD, L, L), attn.shape
    assert jnp.allclose(out, ref_out, atol=1e-3, rtol=1e-3), float(
        jnp.max(jnp.abs(out - ref_out)))
    assert jnp.allclose(attn, ref_attn, atol=1e-3, rtol=1e-3), float(
        jnp.max(jnp.abs(attn - ref_attn)))
    print("KERNEL_OK")
</pallas_src>

<mosaic_0001>
module attributes {stable_mosaic.version = 11 : i64} {
  func.func @attn_encoder_kernel(%arg0: i32, %arg1: memref<1x8x1xi32, #tpu.memory_space<vmem>>, %arg2: memref<16x32xf32, #tpu.memory_space<vmem>>, %arg3: memref<32x32xf32, #tpu.memory_space<vmem>>, %arg4: memref<32x32xf32, #tpu.memory_space<vmem>>, %arg5: memref<32x32xf32, #tpu.memory_space<vmem>>, %arg6: memref<32x32xf32, #tpu.memory_space<vmem>>, %arg7: memref<1x32xf32, #tpu.memory_space<vmem>>, %arg8: memref<1x32xf32, #tpu.memory_space<vmem>>, %arg9: memref<1x1x32xf32, #tpu.memory_space<vmem>>, %arg10: memref<1x1x8x32xf32, #tpu.memory_space<vmem>>) attributes {dimension_semantics = [#tpu.dimension_semantics<parallel>], iteration_bounds = array<i64: 2>, scalar_prefetch = 0 : i64, scratch_operands = 0 : i64, tpu.core_type = #tpu.core_type<tc>, window_params = [{transform_indices = @transform_0, window_bounds = array<i64: 1, 8, 1>}, {pipeline_mode = #tpu.pipeline_mode<synchronous>, transform_indices = @transform_1, window_bounds = array<i64: 16, 32>}, {pipeline_mode = #tpu.pipeline_mode<synchronous>, transform_indices = @transform_2, window_bounds = array<i64: 32, 32>}, {pipeline_mode = #tpu.pipeline_mode<synchronous>, transform_indices = @transform_3, window_bounds = array<i64: 32, 32>}, {pipeline_mode = #tpu.pipeline_mode<synchronous>, transform_indices = @transform_4, window_bounds = array<i64: 32, 32>}, {pipeline_mode = #tpu.pipeline_mode<synchronous>, transform_indices = @transform_5, window_bounds = array<i64: 32, 32>}, {pipeline_mode = #tpu.pipeline_mode<synchronous>, transform_indices = @transform_6, window_bounds = array<i64: 1, 32>}, {pipeline_mode = #tpu.pipeline_mode<synchronous>, transform_indices = @transform_7, window_bounds = array<i64: 1, 32>}, {transform_indices = @transform_8, window_bounds = array<i64: 1, 1, 32>}, {transform_indices = @transform_9, window_bounds = array<i64: 1, 1, 8, 32>}]} {
    %c0 = arith.constant 0 : index
    %c0_0 = arith.constant 0 : index
    %c0_1 = arith.constant 0 : index
    %0 = vector.load %arg1[%c0, %c0_0, %c0_1] : memref<1x8x1xi32, #tpu.memory_space<vmem>>, vector<1x8x1xi32>
    %1 = vector.shape_cast %0 : vector<1x8x1xi32> to vector<8x1xi32>
    %2 = tpu.iota {dimensions = array<i32: 1>} : vector<8x16xi32>
    %3 = vector.broadcast %1 : vector<8x1xi32> to vector<8x16xi32>
    %4 = arith.cmpi eq, %3, %2 : vector<8x16xi32>
    %5 = arith.extui %4 : vector<8x16xi1> to vector<8x16xi32>
    %6 = arith.sitofp %5 : vector<8x16xi32> to vector<8x16xf32>
    %c0_2 = arith.constant 0 : index
    %c0_3 = arith.constant 0 : index
    %7 = vector.load %arg2[%c0_2, %c0_3] : memref<16x32xf32, #tpu.memory_space<vmem>>, vector<16x32xf32>
    %cst = arith.constant dense<0.000000e+00> : vector<8x32xf32>
    %8 = tpu.matmul %6, %7, %cst {dimension_numbers = #tpu.dot_dimension_numbers<[1], [0], [0], [1], [0, 0, 1, 1], [], []>} : vector<8x16xf32>, vector<16x32xf32>, vector<8x32xf32> -> vector<8x32xf32>
    %c0_4 = arith.constant 0 : index
    %c0_5 = arith.constant 0 : index
    %9 = vector.load %arg3[%c0_4, %c0_5] : memref<32x32xf32, #tpu.memory_space<vmem>>, vector<32x32xf32>
    %cst_6 = arith.constant dense<0.000000e+00> : vector<8x32xf32>
    %10 = tpu.matmul %8, %9, %cst_6 {dimension_numbers = #tpu.dot_dimension_numbers<[1], [1], [0], [0], [0, 0, 1, 0], [], []>} : vector<8x32xf32>, vector<32x32xf32>, vector<8x32xf32> -> vector<8x32xf32>
    %c0_7 = arith.constant 0 : index
    %c0_8 = arith.constant 0 : index
    %11 = vector.load %arg4[%c0_7, %c0_8] : memref<32x32xf32, #tpu.memory_space<vmem>>, vector<32x32xf32>
    %cst_9 = arith.constant dense<0.000000e+00> : vector<8x32xf32>
    %12 = tpu.matmul %8, %11, %cst_9 {dimension_numbers = #tpu.dot_dimension_numbers<[1], [1], [0], [0], [0, 0, 1, 0], [], []>} : vector<8x32xf32>, vector<32x32xf32>, vector<8x32xf32> -> vector<8x32xf32>
    %c0_10 = arith.constant 0 : index
    %c0_11 = arith.constant 0 : index
    %13 = vector.load %arg5[%c0_10, %c0_11] : memref<32x32xf32, #tpu.memory_space<vmem>>, vector<32x32xf32>
    %cst_12 = arith.constant dense<0.000000e+00> : vector<8x32xf32>
    %14 = tpu.matmul %8, %13, %cst_12 {dimension_numbers = #tpu.dot_dimension_numbers<[1], [1], [0], [0], [0, 0, 1, 0], [], []>} : vector<8x32xf32>, vector<32x32xf32>, vector<8x32xf32> -> vector<8x32xf32>
    %cst_13 = arith.constant 0.353553385 : f32
    %15 = vector.broadcast %cst_13 : f32 to vector<8x32xf32>
    %16 = arith.mulf %10, %15 : vector<8x32xf32>
    %17 = vector.extract_strided_slice %16 {offsets = [0, 0], sizes = [8, 8], strides = [1, 1]} : vector<8x32xf32> to vector<8x8xf32>
    %18 = vector.shape_cast %17 : vector<8x8xf32> to vector<1x8x8xf32>
    %19 = vector.extract_strided_slice %12 {offsets = [0, 0], sizes = [8, 8], strides = [1, 1]} : vector<8x32xf32> to vector<8x8xf32>
    %20 = vector.shape_cast %19 : vector<8x8xf32> to vector<1x8x8xf32>
    %21 = vector.extract_strided_slice %14 {offsets = [0, 0], sizes = [8, 8], strides = [1, 1]} : vector<8x32xf32> to vector<8x8xf32>
    %22 = vector.shape_cast %21 : vector<8x8xf32> to vector<1x8x8xf32>
    %cst_14 = arith.constant dense<0.000000e+00> : vector<1x8x8xf32>
    %23 = tpu.matmul %18, %20, %cst_14 {dimension_numbers = #tpu.dot_dimension_numbers<[2], [2], [1], [1], [0, 0, 0, 1, 1, 1], [0], [0]>} : vector<1x8x8xf32>, vector<1x8x8xf32>, vector<1x8x8xf32> -> vector<1x8x8xf32>
    %cst_15 = arith.constant dense<0xFF800000> : vector<1x8xf32>
    %24 = vector.multi_reduction <maximumf>, %23, %cst_15 [2] : vector<1x8x8xf32> to vector<1x8xf32>
    %25 = vector.shape_cast %24 : vector<1x8xf32> to vector<1x8x1xf32>
    %26 = vector.broadcast %25 : vector<1x8x1xf32> to vector<1x8x8xf32>
    %27 = arith.subf %23, %26 : vector<1x8x8xf32>
    %28 = math.exp %27 : vector<1x8x8xf32>
    %cst_16 = arith.constant dense<0.000000e+00> : vector<1x8xf32>
    %29 = vector.multi_reduction <add>, %28, %cst_16 [2] : vector<1x8x8xf32> to vector<1x8xf32>
    %30 = vector.shape_cast %29 : vector<1x8xf32> to vector<1x8x1xf32>
    %31 = tpu.reciprocal %30 : vector<1x8x1xf32> -> vector<1x8x1xf32>
    %32 = vector.broadcast %31 : vector<1x8x1xf32> to vector<1x8x8xf32>
    %33 = arith.mulf %28, %32 : vector<1x8x8xf32>
    %cst_17 = arith.constant dense<0.000000e+00> : vector<1x8x8xf32>
    %34 = tpu.matmul %33, %22, %cst_17 {dimension_numbers = #tpu.dot_dimension_numbers<[2], [1], [1], [2], [0, 0, 0, 1, 1, 2], [0], [0]>} : vector<1x8x8xf32>, vector<1x8x8xf32>, vector<1x8x8xf32> -> vector<1x8x8xf32>
    %cst_18 = arith.constant dense<0.000000e+00> : vector<1x8xf32>
    %35 = vector.multi_reduction <add>, %34, %cst_18 [1] : vector<1x8x8xf32> to vector<1x8xf32>
    %36 = vector.extract_strided_slice %16 {offsets = [0, 8], sizes = [8, 8], strides = [1, 1]} : vector<8x32xf32> to vector<8x8xf32>
    %37 = vector.shape_cast %36 : vector<8x8xf32> to vector<1x8x8xf32>
    %38 = vector.extract_strided_slice %12 {offsets = [0, 8], sizes = [8, 8], strides = [1, 1]} : vector<8x32xf32> to vector<8x8xf32>
    %39 = vector.shape_cast %38 : vector<8x8xf32> to vector<1x8x8xf32>
    %40 = vector.extract_strided_slice %14 {offsets = [0, 8], sizes = [8, 8], strides = [1, 1]} : vector<8x32xf32> to vector<8x8xf32>
    %41 = vector.shape_cast %40 : vector<8x8xf32> to vector<1x8x8xf32>
    %cst_19 = arith.constant dense<0.000000e+00> : vector<1x8x8xf32>
    %42 = tpu.matmul %37, %39, %cst_19 {dimension_numbers = #tpu.dot_dimension_numbers<[2], [2], [1], [1], [0, 0, 0, 1, 1, 1], [0], [0]>} : vector<1x8x8xf32>, vector<1x8x8xf32>, vector<1x8x8xf32> -> vector<1x8x8xf32>
    %cst_20 = arith.constant dense<0xFF800000> : vector<1x8xf32>
    %43 = vector.multi_reduction <maximumf>, %42, %cst_20 [2] : vector<1x8x8xf32> to vector<1x8xf32>
    %44 = vector.shape_cast %43 : vector<1x8xf32> to vector<1x8x1xf32>
    %45 = vector.broadcast %44 : vector<1x8x1xf32> to vector<1x8x8xf32>
    %46 = arith.subf %42, %45 : vector<1x8x8xf32>
    %47 = math.exp %46 : vector<1x8x8xf32>
    %cst_21 = arith.constant dense<0.000000e+00> : vector<1x8xf32>
    %48 = vector.multi_reduction <add>, %47, %cst_21 [2] : vector<1x8x8xf32> to vector<1x8xf32>
    %49 = vector.shape_cast %48 : vector<1x8xf32> to vector<1x8x1xf32>
    %50 = tpu.reciprocal %49 : vector<1x8x1xf32> -> vector<1x8x1xf32>
    %51 = vector.broadcast %50 : vector<1x8x1xf32> to vector<1x8x8xf32>
    %52 = arith.mulf %47, %51 : vector<1x8x8xf32>
    %cst_22 = arith.constant dense<0.000000e+00> : vector<1x8x8xf32>
    %53 = tpu.matmul %52, %41, %cst_22 {dimension_numbers = #tpu.dot_dimension_numbers<[2], [1], [1], [2], [0, 0, 0, 1, 1, 2], [0], [0]>} : vector<1x8x8xf32>, vector<1x8x8xf32>, vector<1x8x8xf32> -> vector<1x8x8xf32>
    %cst_23 = arith.constant dense<0.000000e+00> : vector<1x8xf32>
    %54 = vector.multi_reduction <add>, %53, %cst_23 [1] : vector<1x8x8xf32> to vector<1x8xf32>
    %55 = vector.extract_strided_slice %16 {offsets = [0, 16], sizes = [8, 8], strides = [1, 1]} : vector<8x32xf32> to vector<8x8xf32>
    %56 = vector.shape_cast %55 : vector<8x8xf32> to vector<1x8x8xf32>
    %57 = vector.extract_strided_slice %12 {offsets = [0, 16], sizes = [8, 8], strides = [1, 1]} : vector<8x32xf32> to vector<8x8xf32>
    %58 = vector.shape_cast %57 : vector<8x8xf32> to vector<1x8x8xf32>
    %59 = vector.extract_strided_slice %14 {offsets = [0, 16], sizes = [8, 8], strides = [1, 1]} : vector<8x32xf32> to vector<8x8xf32>
    %60 = vector.shape_cast %59 : vector<8x8xf32> to vector<1x8x8xf32>
    %cst_24 = arith.constant dense<0.000000e+00> : vector<1x8x8xf32>
    %61 = tpu.matmul %56, %58, %cst_24 {dimension_numbers = #tpu.dot_dimension_numbers<[2], [2], [1], [1], [0, 0, 0, 1, 1, 1], [0], [0]>} : vector<1x8x8xf32>, vector<1x8x8xf32>, vector<1x8x8xf32> -> vector<1x8x8xf32>
    %cst_25 = arith.constant dense<0xFF800000> : vector<1x8xf32>
    %62 = vector.multi_reduction <maximumf>, %61, %cst_25 [2] : vector<1x8x8xf32> to vector<1x8xf32>
    %63 = vector.shape_cast %62 : vector<1x8xf32> to vector<1x8x1xf32>
    %64 = vector.broadcast %63 : vector<1x8x1xf32> to vector<1x8x8xf32>
    %65 = arith.subf %61, %64 : vector<1x8x8xf32>
    %66 = math.exp %65 : vector<1x8x8xf32>
    %cst_26 = arith.constant dense<0.000000e+00> : vector<1x8xf32>
    %67 = vector.multi_reduction <add>, %66, %cst_26 [2] : vector<1x8x8xf32> to vector<1x8xf32>
    %68 = vector.shape_cast %67 : vector<1x8xf32> to vector<1x8x1xf32>
    %69 = tpu.reciprocal %68 : vector<1x8x1xf32> -> vector<1x8x1xf32>
    %70 = vector.broadcast %69 : vector<1x8x1xf32> to vector<1x8x8xf32>
    %71 = arith.mulf %66, %70 : vector<1x8x8xf32>
    %cst_27 = arith.constant dense<0.000000e+00> : vector<1x8x8xf32>
    %72 = tpu.matmul %71, %60, %cst_27 {dimension_numbers = #tpu.dot_dimension_numbers<[2], [1], [1], [2], [0, 0, 0, 1, 1, 2], [0], [0]>} : vector<1x8x8xf32>, vector<1x8x8xf32>, vector<1x8x8xf32> -> vector<1x8x8xf32>
    %cst_28 = arith.constant dense<0.000000e+00> : vector<1x8xf32>
    %73 = vector.multi_reduction <add>, %72, %cst_28 [1] : vector<1x8x8xf32> to vector<1x8xf32>
    %74 = vector.extract_strided_slice %16 {offsets = [0, 24], sizes = [8, 8], strides = [1, 1]} : vector<8x32xf32> to vector<8x8xf32>
    %75 = vector.shape_cast %74 : vector<8x8xf32> to vector<1x8x8xf32>
    %76 = vector.extract_strided_slice %12 {offsets = [0, 24], sizes = [8, 8], strides = [1, 1]} : vector<8x32xf32> to vector<8x8xf32>
    %77 = vector.shape_cast %76 : vector<8x8xf32> to vector<1x8x8xf32>
    %78 = vector.extract_strided_slice %14 {offsets = [0, 24], sizes = [8, 8], strides = [1, 1]} : vector<8x32xf32> to vector<8x8xf32>
    %79 = vector.shape_cast %78 : vector<8x8xf32> to vector<1x8x8xf32>
    %cst_29 = arith.constant dense<0.000000e+00> : vector<1x8x8xf32>
    %80 = tpu.matmul %75, %77, %cst_29 {dimension_numbers = #tpu.dot_dimension_numbers<[2], [2], [1], [1], [0, 0, 0, 1, 1, 1], [0], [0]>} : vector<1x8x8xf32>, vector<1x8x8xf32>, vector<1x8x8xf32> -> vector<1x8x8xf32>
    %cst_30 = arith.constant dense<0xFF800000> : vector<1x8xf32>
    %81 = vector.multi_reduction <maximumf>, %80, %cst_30 [2] : vector<1x8x8xf32> to vector<1x8xf32>
    %82 = vector.shape_cast %81 : vector<1x8xf32> to vector<1x8x1xf32>
    %83 = vector.broadcast %82 : vector<1x8x1xf32> to vector<1x8x8xf32>
    %84 = arith.subf %80, %83 : vector<1x8x8xf32>
    %85 = math.exp %84 : vector<1x8x8xf32>
    %cst_31 = arith.constant dense<0.000000e+00> : vector<1x8xf32>
    %86 = vector.multi_reduction <add>, %85, %cst_31 [2] : vector<1x8x8xf32> to vector<1x8xf32>
    %87 = vector.shape_cast %86 : vector<1x8xf32> to vector<1x8x1xf32>
    %88 = tpu.reciprocal %87 : vector<1x8x1xf32> -> vector<1x8x1xf32>
    %89 = vector.broadcast %88 : vector<1x8x1xf32> to vector<1x8x8xf32>
    %90 = arith.mulf %85, %89 : vector<1x8x8xf32>
    %cst_32 = arith.constant dense<0.000000e+00> : vector<1x8x8xf32>
    %91 = tpu.matmul %90, %79, %cst_32 {dimension_numbers = #tpu.dot_dimension_numbers<[2], [1], [1], [2], [0, 0, 0, 1, 1, 2], [0], [0]>} : vector<1x8x8xf32>, vector<1x8x8xf32>, vector<1x8x8xf32> -> vector<1x8x8xf32>
    %cst_33 = arith.constant dense<0.000000e+00> : vector<1x8xf32>
    %92 = vector.multi_reduction <add>, %91, %cst_33 [1] : vector<1x8x8xf32> to vector<1x8xf32>
    %93 = tpu.concatenate %33, %52, %71, %90 in 2 : vector<1x8x8xf32>, vector<1x8x8xf32>, vector<1x8x8xf32>, vector<1x8x8xf32> -> vector<1x8x32xf32>
    %c0_34 = arith.constant 0 : index
    %c0_35 = arith.constant 0 : index
    %c0_36 = arith.constant 0 : index
    %c0_37 = arith.constant 0 : index
    %94 = vector.load %arg10[%c0_34, %c0_35, %c0_36, %c0_37] : memref<1x1x8x32xf32, #tpu.memory_space<vmem>>, vector<1x1x8x32xf32>
    %95 = vector.shape_cast %94 : vector<1x1x8x32xf32> to vector<1x8x32xf32>
    %96 = vector.shape_cast %93 : vector<1x8x32xf32> to vector<1x1x8x32xf32>
    tpu.vector_store %arg10[%c0_34, %c0_35, %c0_36, %c0_37], %96 {strides = array<i32>} : memref<1x1x8x32xf32, #tpu.memory_space<vmem>>, vector<1x1x8x32xf32>,
    %97 = tpu.concatenate %35, %54, %73, %92 in 1 : vector<1x8xf32>, vector<1x8xf32>, vector<1x8xf32>, vector<1x8xf32> -> vector<1x32xf32>
    %c0_38 = arith.constant 0 : index
    %c0_39 = arith.constant 0 : index
    %98 = vector.load %arg6[%c0_38, %c0_39] : memref<32x32xf32, #tpu.memory_space<vmem>>, vector<32x32xf32>
    %cst_40 = arith.constant dense<0.000000e+00> : vector<1x32xf32>
    %99 = tpu.matmul %97, %98, %cst_40 {dimension_numbers = #tpu.dot_dimension_numbers<[1], [1], [0], [0], [0, 0, 1, 0], [], []>} : vector<1x32xf32>, vector<32x32xf32>, vector<1x32xf32> -> vector<1x32xf32>
    %cst_41 = arith.constant dense<0.000000e+00> : vector<1xf32>
    %100 = vector.multi_reduction <add>, %99, %cst_41 [1] : vector<1x32xf32> to vector<1xf32>
    %101 = vector.shape_cast %100 : vector<1xf32> to vector<1x1xf32>
    %cst_42 = arith.constant 3.200000e+01 : f32
    %102 = vector.broadcast %cst_42 : f32 to vector<1x1xf32>
    %103 = arith.divf %101, %102 : vector<1x1xf32>
    %104 = vector.broadcast %103 : vector<1x1xf32> to vector<1x32xf32>
    %105 = arith.subf %99, %104 : vector<1x32xf32>
    %106 = arith.mulf %105, %105 : vector<1x32xf32>
    %cst_43 = arith.constant dense<0.000000e+00> : vector<1xf32>
    %107 = vector.multi_reduction <add>, %106, %cst_43 [1] : vector<1x32xf32> to vector<1xf32>
    %108 = vector.shape_cast %107 : vector<1xf32> to vector<1x1xf32>
    %cst_44 = arith.constant 3.200000e+01 : f32
    %109 = vector.broadcast %cst_44 : f32 to vector<1x1xf32>
    %110 = arith.divf %108, %109 : vector<1x1xf32>
    %111 = vector.broadcast %103 : vector<1x1xf32> to vector<1x32xf32>
    %112 = arith.subf %99, %111 : vector<1x32xf32>
    %cst_45 = arith.constant 9.99999997E-7 : f32
    %113 = vector.broadcast %cst_45 : f32 to vector<1x1xf32>
    %114 = arith.addf %110, %113 : vector<1x1xf32>
    %115 = math.rsqrt %114 : vector<1x1xf32>
    %116 = vector.broadcast %115 : vector<1x1xf32> to vector<1x32xf32>
    %117 = arith.mulf %112, %116 : vector<1x32xf32>
    %c0_46 = arith.constant 0 : index
    %c0_47 = arith.constant 0 : index
    %118 = vector.load %arg7[%c0_46, %c0_47] : memref<1x32xf32, #tpu.memory_space<vmem>>, vector<1x32xf32>
    %119 = arith.mulf %117, %118 : vector<1x32xf32>
    %c0_48 = arith.constant 0 : index
    %c0_49 = arith.constant 0 : index
    %120 = vector.load %arg8[%c0_48, %c0_49] : memref<1x32xf32, #tpu.memory_space<vmem>>, vector<1x32xf32>
    %121 = arith.addf %119, %120 : vector<1x32xf32>
    %c0_50 = arith.constant 0 : index
    %c0_51 = arith.constant 0 : index
    %c0_52 = arith.constant 0 : index
    %122 = vector.load %arg9[%c0_50, %c0_51, %c0_52] : memref<1x1x32xf32, #tpu.memory_space<vmem>>, vector<1x1x32xf32>
    %123 = vector.shape_cast %122 : vector<1x1x32xf32> to vector<1x32xf32>
    %124 = vector.shape_cast %121 : vector<1x32xf32> to vector<1x1x32xf32>
    tpu.vector_store %arg9[%c0_50, %c0_51, %c0_52], %124 {strides = array<i32>} : memref<1x1x32xf32, #tpu.memory_space<vmem>>, vector<1x1x32xf32>,
    return
  }
  func.func @transform_0(%arg0: i32) -> (i32, i32, i32) {
    %c0_i32 = arith.constant 0 : i32
    %c0_i32_0 = arith.constant 0 : i32
    %c0_i32_1 = arith.constant 0 : i32
    return %arg0, %c0_i32, %c0_i32_0 : i32, i32, i32
  }
  func.func @transform_1(%arg0: i32) -> (i32, i32) {
    %c0_i32 = arith.constant 0 : i32
    %c0_i32_0 = arith.constant 0 : i32
    %c0_i32_1 = arith.constant 0 : i32
    return %c0_i32, %c0_i32_0 : i32, i32
  }
  func.func @transform_2(%arg0: i32) -> (i32, i32) {
    %c0_i32 = arith.constant 0 : i32
    %c0_i32_0 = arith.constant 0 : i32
    %c0_i32_1 = arith.constant 0 : i32
    return %c0_i32, %c0_i32_0 : i32, i32
  }
  func.func @transform_3(%arg0: i32) -> (i32, i32) {
    %c0_i32 = arith.constant 0 : i32
    %c0_i32_0 = arith.constant 0 : i32
    %c0_i32_1 = arith.constant 0 : i32
    return %c0_i32, %c0_i32_0 : i32, i32
  }
  func.func @transform_4(%arg0: i32) -> (i32, i32) {
    %c0_i32 = arith.constant 0 : i32
    %c0_i32_0 = arith.constant 0 : i32
    %c0_i32_1 = arith.constant 0 : i32
    return %c0_i32, %c0_i32_0 : i32, i32
  }
  func.func @transform_5(%arg0: i32) -> (i32, i32) {
    %c0_i32 = arith.constant 0 : i32
    %c0_i32_0 = arith.constant 0 : i32
    %c0_i32_1 = arith.constant 0 : i32
    return %c0_i32, %c0_i32_0 : i32, i32
  }
  func.func @transform_6(%arg0: i32) -> (i32, i32) {
    %c0_i32 = arith.constant 0 : i32
    %c0_i32_0 = arith.constant 0 : i32
    %c0_i32_1 = arith.constant 0 : i32
    return %c0_i32, %c0_i32_0 : i32, i32
  }
  func.func @transform_7(%arg0: i32) -> (i32, i32) {
    %c0_i32 = arith.constant 0 : i32
    %c0_i32_0 = arith.constant 0 : i32
    %c0_i32_1 = arith.constant 0 : i32
    return %c0_i32, %c0_i32_0 : i32, i32
  }
  func.func @transform_8(%arg0: i32) -> (i32, i32, i32) {
    %c0_i32 = arith.constant 0 : i32
    %c0_i32_0 = arith.constant 0 : i32
    %c0_i32_1 = arith.constant 0 : i32
    return %arg0, %c0_i32, %c0_i32_0 : i32, i32, i32
  }
  func.func @transform_9(%arg0: i32) -> (i32, i32, i32, i32) {
    %c0_i32 = arith.constant 0 : i32
    %c0_i32_0 = arith.constant 0 : i32
    %c0_i32_1 = arith.constant 0 : i32
    %c0_i32_2 = arith.constant 0 : i32
    return %arg0, %c0_i32, %c0_i32_0, %c0_i32_1 : i32, i32, i32, i32
  }
}

</mosaic_0001>

<llo_original>
// kernel: tag_self_attention_forward.1
$region0: #{tag_self_attention_forward.1}
  #allocation0 [shape = 'u32[]', space=smem, size = 0x4, offset = 0x4, fixed_abs, tag = 'smem constant byte address 0x4 - core index']
  #allocation1 [shape = 'u32[144,128]{1,0:T(1,128)}', space=vmem, size = 0x12000, scoped, tag = 'internal scratch']
  %s0 = inlined_call_operand.vmem [shape: s32[2,8,1], index: 0, kind: input, shape index: {}]
  %s1 = inlined_call_operand.hbm [shape: f32[16,32], index: 1, kind: input, shape index: {}]
  %s2 = inlined_call_operand.hbm [shape: f32[32,32], index: 2, kind: input, shape index: {}]
  %s3 = inlined_call_operand.hbm [shape: f32[32,32], index: 3, kind: input, shape index: {}]
  %s4 = inlined_call_operand.hbm [shape: f32[32,32], index: 4, kind: input, shape index: {}]
  %s5 = inlined_call_operand.vmem [shape: f32[32,32], index: 5, kind: input, shape index: {}]
  %s6 = inlined_call_operand.vmem [shape: f32[1,32], index: 6, kind: input, shape index: {}]
  %s7 = inlined_call_operand.vmem [shape: f32[1,32], index: 7, kind: input, shape index: {}]
  %s8 = inlined_call_operand.hbm [shape: f32[2,1,32], index: 8, kind: output, shape index: {0}]
  %s9 = inlined_call_operand.vmem [shape: f32[2,1,8,32], index: 9, kind: output, shape index: {1}]
  %10 = xla_tuple %s8, %s9
  %s11 = sld [smem:[#allocation0]]
  $region89: #{tag_self_attention_forward.1} parent=0
    _
  %s13 = ssub.s32 1, %s11
  %s14 = scalar_select 0, %s13, %s11
  $region1: #{tag_self_attention_forward.1} parent=0
    #allocation2 [shape = 'u8[8192]{0}', space=vmem, size = 0x2000, scoped, tag = 'input window, operand 1, single buffered']
    #allocation3 [shape = 's32[2]{0}', space=sflag, size = 0x8, scoped, tag = 'scoped memory for tag_self_attention_forward.1']
    #allocation4 [shape = 's32[2]{0}', space=sflag, size = 0x8, scoped, tag = 'scoped memory for tag_self_attention_forward.1']
    #allocation5 [shape = 'u8[16384]{0}', space=vmem, size = 0x4000, scoped, tag = 'input window, operand 2, single buffered']
    #allocation6 [shape = 's32[1]{0}', space=sflag, size = 0x4, scoped, tag = 'scoped memory for tag_self_attention_forward.1']
    #allocation7 [shape = 'u8[16384]{0}', space=vmem, size = 0x4000, scoped, tag = 'input window, operand 3, single buffered']
    #allocation8 [shape = 'u8[16384]{0}', space=vmem, size = 0x4000, scoped, tag = 'input window, operand 4, single buffered']
    #allocation9 [shape = 's32[1]{0}', space=sflag, size = 0x4, scoped, tag = 'scoped memory for tag_self_attention_forward.1']
    #allocation10 [shape = 'u8[1024]{0}', space=vmem, size = 0x400, scoped, tag = 'output window, operand 0']
    %15 = vsyncpa [#allocation3], 0
    %16 = vsyncpa [#allocation6], 0
    %17 = vsyncpa [#allocation9], 0
    %18 = vsyncpa [#allocation4], 0
    %s19 = scalar_lea.sflag [#allocation4], 1
    %20 = vsyncpa %s19, 0
    loop: start=0, step=1, limit=4
    $region2: #{tag_self_attention_forward.1} parent=1 // loop_pre_header
      _
    $region3: #{tag_self_attention_forward.1} parent=1 // loop_header
      %s22 = sphi 0, %s26
      %p23 = scmp.ge.s32.totalorder %s22, 4
      %s32 = sphi 0, %s34
      %s35 = sphi 0, %s32
      %s36 = sphi 0, %s35
      %s52 = sphi 0, %s36
      %s56 = sphi 0, %s56
      %s58 = sphi 0, %s56
      %s59 = sphi 0, %s58
      %s73 = sphi 0, %s59
      %s77 = sphi 0, %s77
      %s79 = sphi 0, %s77
      %s80 = sphi 0, %s79
      %s94 = sphi 0, %s80
      %s98 = sphi 0, %s98
      %s100 = sphi 0, %s98
      %s101 = sphi 0, %s100
      %s115 = sphi 0, %s101
      %s119 = sphi 0, %s119
      %s121 = sphi 0, %s119
      %s122 = sphi 0, %s121
      %s136 = sphi 0, %s122
      %s140 = sphi 0, %s140
      %s142 = sphi 0, %s140
      %s143 = sphi 0, %s142
      %s157 = sphi 0, %s143
      %s161 = sphi 0, %s161
      %s163 = sphi 0, %s161
      %s164 = sphi 0, %s163
      %s178 = sphi 0, %s164
      %s182 = sphi 0, %s182
      %s184 = sphi 0, %s182
      %s185 = sphi 0, %s184
      %s199 = sphi 0, %s185
      %s205 = sphi 0, %s207
      %s208 = sphi 0, %s205
      %s209 = sphi 0, %s208
      %s225 = sphi 0, %s209
      %s231 = sphi 0, %s233
      %s234 = sphi 0, %s231
      %s235 = sphi 0, %s234
      %s251 = sphi 0, %s235
    $region4: #{tag_self_attention_forward.1} parent=1 // loop_header_branch
      %25 = sbr.rel (%p23) target = $region8
    $region5: #{tag_self_attention_forward.1} parent=1 // loop_body
      %s27 = ssub.s32 %s22, 1
      %s28 = ssub.s32 %s22, 2
      %s29 = sadd.s32 %s22, 1
      %s30 = ssub.s32 %s22, %s29
      %p31 = scmp.eq.s32.totalorder %s30, 0
      %s33 = sadd.s32 %s32, 1
      %s34 = scalar_select %p31, %s32, %s33
      %p37 = pneg %p31
      %p38 = scmp.eq.s32.totalorder %s22, 1
      %p39 = por %p37, %p38
      %p40 = scmp.ne.s32.totalorder %s32, %s35
      %p41 = scmp.eq.s32.totalorder %s22, 0
      %p42 = por %p40, %p41
      %p43 = scmp.ne.s32.totalorder %s32, %s35
      %p44 = scmp.eq.s32.totalorder %s27, 1
      %p45 = por %p43, %p44
      %p46 = scmp.ne.s32.totalorder %s35, %s36
      %p47 = scmp.eq.s32.totalorder %s27, 0
      %p48 = por %p46, %p47
      %p49 = scmp.ne.s32.totalorder %s35, %s36
      %p50 = scmp.eq.s32.totalorder %s28, 1
      %p51 = por %p49, %p50
      %p53 = scmp.ne.s32.totalorder %s36, %s52
      %p54 = scmp.eq.s32.totalorder %s28, 0
      %p55 = por %p53, %p54
      %s57 = sadd.s32 %s56, 1
      %p60 = scmp.eq.s32.totalorder %s22, 1
      %p61 = scmp.ne.s32.totalorder %s56, %s58
      %p62 = scmp.eq.s32.totalorder %s22, 0
      %p63 = por %p61, %p62
      %p64 = scmp.ne.s32.totalorder %s56, %s58
      %p65 = scmp.eq.s32.totalorder %s27, 1
      %p66 = por %p64, %p65
      %p67 = scmp.ne.s32.totalorder %s58, %s59
      %p68 = scmp.eq.s32.totalorder %s27, 0
      %p69 = por %p67, %p68
      %p70 = scmp.ne.s32.totalorder %s58, %s59
      %p71 = scmp.eq.s32.totalorder %s28, 1
      %p72 = por %p70, %p71
      %p74 = scmp.ne.s32.totalorder %s59, %s73
      %p75 = scmp.eq.s32.totalorder %s28, 0
      %p76 = por %p74, %p75
      %s78 = sadd.s32 %s77, 1
      %p81 = scmp.eq.s32.totalorder %s22, 1
      %p82 = scmp.ne.s32.totalorder %s77, %s79
      %p83 = scmp.eq.s32.totalorder %s22, 0
      %p84 = por %p82, %p83
      %p85 = scmp.ne.s32.totalorder %s77, %s79
      %p86 = scmp.eq.s32.totalorder %s27, 1
      %p87 = por %p85, %p86
      %p88 = scmp.ne.s32.totalorder %s79, %s80
      %p89 = scmp.eq.s32.totalorder %s27, 0
      %p90 = por %p88, %p89
      %p91 = scmp.ne.s32.totalorder %s79, %s80
      %p92 = scmp.eq.s32.totalorder %s28, 1
      %p93 = por %p91, %p92
      %p95 = scmp.ne.s32.totalorder %s80, %s94
      %p96 = scmp.eq.s32.totalorder %s28, 0
      %p97 = por %p95, %p96
      %s99 = sadd.s32 %s98, 1
      %p102 = scmp.eq.s32.totalorder %s22, 1
      %p103 = scmp.ne.s32.totalorder %s98, %s100
      %p104 = scmp.eq.s32.totalorder %s22, 0
      %p105 = por %p103, %p104
      %p106 = scmp.ne.s32.totalorder %s98, %s100
      %p107 = scmp.eq.s32.totalorder %s27, 1
      %p108 = por %p106, %p107
      %p109 = scmp.ne.s32.totalorder %s100, %s101
      %p110 = scmp.eq.s32.totalorder %s27, 0
      %p111 = por %p109, %p110
      %p112 = scmp.ne.s32.totalorder %s100, %s101
      %p113 = scmp.eq.s32.totalorder %s28, 1
      %p114 = por %p112, %p113
      %p116 = scmp.ne.s32.totalorder %s101, %s115
      %p117 = scmp.eq.s32.totalorder %s28, 0
      %p118 = por %p116, %p117
      %s120 = sadd.s32 %s119, 1
      %p123 = scmp.eq.s32.totalorder %s22, 1
      %p124 = scmp.ne.s32.totalorder %s119, %s121
      %p125 = scmp.eq.s32.totalorder %s22, 0
      %p126 = por %p124, %p125
      %p127 = scmp.ne.s32.totalorder %s119, %s121
      %p128 = scmp.eq.s32.totalorder %s27, 1
      %p129 = por %p127, %p128
      %p130 = scmp.ne.s32.totalorder %s121, %s122
      %p131 = scmp.eq.s32.totalorder %s27, 0
      %p132 = por %p130, %p131
      %p133 = scmp.ne.s32.totalorder %s121, %s122
      %p134 = scmp.eq.s32.totalorder %s28, 1
      %p135 = por %p133, %p134
      %p137 = scmp.ne.s32.totalorder %s122, %s136
      %p138 = scmp.eq.s32.totalorder %s28, 0
      %p139 = por %p137, %p138
      %s141 = sadd.s32 %s140, 1
      %p144 = scmp.eq.s32.totalorder %s22, 1
      %p145 = scmp.ne.s32.totalorder %s140, %s142
      %p146 = scmp.eq.s32.totalorder %s22, 0
      %p147 = por %p145, %p146
      %p148 = scmp.ne.s32.totalorder %s140, %s142
      %p149 = scmp.eq.s32.totalorder %s27, 1
      %p150 = por %p148, %p149
      %p151 = scmp.ne.s32.totalorder %s142, %s143
      %p152 = scmp.eq.s32.totalorder %s27, 0
      %p153 = por %p151, %p152
      %p154 = scmp.ne.s32.totalorder %s142, %s143
      %p155 = scmp.eq.s32.totalorder %s28, 1
      %p156 = por %p154, %p155
      %p158 = scmp.ne.s32.totalorder %s143, %s157
      %p159 = scmp.eq.s32.totalorder %s28, 0
      %p160 = por %p158, %p159
      %s162 = sadd.s32 %s161, 1
      %p165 = scmp.eq.s32.totalorder %s22, 1
      %p166 = scmp.ne.s32.totalorder %s161, %s163
      %p167 = scmp.eq.s32.totalorder %s22, 0
      %p168 = por %p166, %p167
      %p169 = scmp.ne.s32.totalorder %s161, %s163
      %p170 = scmp.eq.s32.totalorder %s27, 1
      %p171 = por %p169, %p170
      %p172 = scmp.ne.s32.totalorder %s163, %s164
      %p173 = scmp.eq.s32.totalorder %s27, 0
      %p174 = por %p172, %p173
      %p175 = scmp.ne.s32.totalorder %s163, %s164
      %p176 = scmp.eq.s32.totalorder %s28, 1
      %p177 = por %p175, %p176
      %p179 = scmp.ne.s32.totalorder %s164, %s178
      %p180 = scmp.eq.s32.totalorder %s28, 0
      %p181 = por %p179, %p180
      %s183 = sadd.s32 %s182, 1
      %p186 = scmp.eq.s32.totalorder %s22, 1
      %p187 = scmp.ne.s32.totalorder %s182, %s184
      %p188 = scmp.eq.s32.totalorder %s22, 0
      %p189 = por %p187, %p188
      %p190 = scmp.ne.s32.totalorder %s182, %s184
      %p191 = scmp.eq.s32.totalorder %s27, 1
      %p192 = por %p190, %p191
      %p193 = scmp.ne.s32.totalorder %s184, %s185
      %p194 = scmp.eq.s32.totalorder %s27, 0
      %p195 = por %p193, %p194
      %p196 = scmp.ne.s32.totalorder %s184, %s185
      %p197 = scmp.eq.s32.totalorder %s28, 1
      %p198 = por %p196, %p197
      %p200 = scmp.ne.s32.totalorder %s185, %s199
      %p201 = scmp.eq.s32.totalorder %s28, 0
      %p202 = por %p200, %p201
      %s203 = ssub.s32 %s22, %s29
      %p204 = scmp.eq.s32.totalorder %s203, 0
      %s206 = sadd.s32 %s205, 1
      %s207 = scalar_select %p204, %s205, %s206
      %p210 = pneg %p204
      %p211 = scmp.eq.s32.totalorder %s22, 1
      %p212 = por %p210, %p211
      %p213 = scmp.ne.s32.totalorder %s205, %s208
      %p214 = scmp.eq.s32.totalorder %s22, 0
      %p215 = por %p213, %p214
      %p216 = scmp.ne.s32.totalorder %s205, %s208
      %p217 = scmp.eq.s32.totalorder %s27, 1
      %p218 = por %p216, %p217
      %p219 = scmp.ne.s32.totalorder %s208, %s209
      %p220 = scmp.eq.s32.totalorder %s27, 0
      %p221 = por %p219, %p220
      %p222 = scmp.ne.s32.totalorder %s208, %s209
      %p223 = scmp.eq.s32.totalorder %s28, 1
      %p224 = por %p222, %p223
      %p226 = scmp.ne.s32.totalorder %s209, %s225
      %p227 = scmp.eq.s32.totalorder %s28, 0
      %p228 = por %p226, %p227
      %s229 = ssub.s32 %s22, %s29
      %p230 = scmp.eq.s32.totalorder %s229, 0
      %s232 = sadd.s32 %s231, 1
      %s233 = scalar_select %p230, %s231, %s232
      %p236 = pneg %p230
      %p237 = scmp.eq.s32.totalorder %s22, 1
      %p238 = por %p236, %p237
      %p239 = scmp.ne.s32.totalorder %s231, %s234
      %p240 = scmp.eq.s32.totalorder %s22, 0
      %p241 = por %p239, %p240
      %p242 = scmp.ne.s32.totalorder %s231, %s234
      %p243 = scmp.eq.s32.totalorder %s27, 1
      %p244 = por %p242, %p243
      %p245 = scmp.ne.s32.totalorder %s234, %s235
      %p246 = scmp.eq.s32.totalorder %s27, 0
      %p247 = por %p245, %p246
      %p248 = scmp.ne.s32.totalorder %s234, %s235
      %p249 = scmp.eq.s32.totalorder %s28, 1
      %p250 = por %p248, %p249
      %p252 = scmp.ne.s32.totalorder %s235, %s251
      %p253 = scmp.eq.s32.totalorder %s28, 0
      %p254 = por %p252, %p253
      %p255 = scmp.le.s32.totalorder 1, %s22
      %p256 = scmp.lt.s32.totalorder %s22, 3
      %p257 = pnand %p255, %p256
      %p258 = pneg %p257
      // Predicated region
      $region9: #{tag_self_attention_forward.1} parent=5 // pred_check
        _
      $region10: #{tag_self_attention_forward.1} parent=5 // pred_check_branch
        %260 = sbr.rel (%p257) target = $region12
      $region11: #{tag_self_attention_forward.1} parent=5 // pred_region
        %s261 = ssub.s32 %s22, 1
        // Predicated region
        $region13: #{tag_self_attention_forward.1} parent=11 // pred_check
          %p262 = pneg %p69
        $region14: #{tag_self_attention_forward.1} parent=11 // pred_check_branch
          %264 = sbr.rel (%p262) target = $region16
        $region15: #{tag_self_attention_forward.1} parent=11 // pred_region
          %s266 = ssub.s32 256, 256
          %267 = vsyncadd [#allocation3], %s266
          %s268 = sshll.u32 [#allocation2], 4
          %s269 = int_to_ptr.vmem [resolvable:$true] %s268
          %274 = dma.hbm_to_vmem [thread:$0]  %s1, 256, %s269, [#allocation3], 128, 128, 8
        $region16: #{tag_self_attention_forward.1} parent=11 // pred_fallthru
          _
        // Predicated region
        $region17: #{tag_self_attention_forward.1} parent=11 // pred_check
          %p275 = pneg %p90
        $region18: #{tag_self_attention_forward.1} parent=11 // pred_check_branch
          %277 = sbr.rel (%p275) target = $region20
        $region19: #{tag_self_attention_forward.1} parent=11 // pred_region
          %s279 = ssub.s32 512, 512
          %280 = vsyncadd [#allocation6], %s279
          %s281 = sshll.u32 [#allocation5], 4
          %s282 = int_to_ptr.vmem [resolvable:$true] %s281
          %287 = dma.hbm_to_vmem [thread:$0]  %s2, 512, %s282, [#allocation6], 128, 128, 8
        $region20: #{tag_self_attention_forward.1} parent=11 // pred_fallthru
          _
        // Predicated region
        $region21: #{tag_self_attention_forward.1} parent=11 // pred_check
          %p288 = pneg %p111
        $region22: #{tag_self_attention_forward.1} parent=11 // pred_check_branch
          %290 = sbr.rel (%p288) target = $region24
        $region23: #{tag_self_attention_forward.1} parent=11 // pred_region
          %s292 = ssub.s32 512, 512
          %293 = vsyncadd [#allocation6], %s292
          %s294 = sshll.u32 [#allocation7], 4
          %s295 = int_to_ptr.vmem [resolvable:$true] %s294
          %300 = dma.hbm_to_vmem [thread:$0]  %s3, 512, %s295, [#allocation6], 128, 128, 8
        $region24: #{tag_self_attention_forward.1} parent=11 // pred_fallthru
          _
        // Predicated region
        $region25: #{tag_self_attention_forward.1} parent=11 // pred_check
          %p301 = pneg %p132
        $region26: #{tag_self_attention_forward.1} parent=11 // pred_check_branch
          %303 = sbr.rel (%p301) target = $region28
        $region27: #{tag_self_attention_forward.1} parent=11 // pred_region
          %s305 = ssub.s32 512, 512
          %306 = vsyncadd [#allocation9], %s305
          %s307 = sshll.u32 [#allocation8], 4
          %s308 = int_to_ptr.vmem [resolvable:$true] %s307
          %313 = dma.hbm_to_vmem [thread:$0]  %s4, 512, %s308, [#allocation9], 128, 128, 8
        $region28: #{tag_self_attention_forward.1} parent=11 // pred_fallthru
          _
        // Predicated region
        $region29: #{tag_self_attention_forward.1} parent=11 // pred_check
          %p314 = pneg %p153
        $region30: #{tag_self_attention_forward.1} parent=11 // pred_check_branch
          %316 = sbr.rel (%p314) target = $region32
        $region31: #{tag_self_attention_forward.1} parent=11 // pred_region
          _
        $region32: #{tag_self_attention_forward.1} parent=11 // pred_fallthru
          _
        // Predicated region
        $region33: #{tag_self_attention_forward.1} parent=11 // pred_check
          %p317 = pneg %p174
        $region34: #{tag_self_attention_forward.1} parent=11 // pred_check_branch
          %319 = sbr.rel (%p317) target = $region36
        $region35: #{tag_self_attention_forward.1} parent=11 // pred_region
          _
        $region36: #{tag_self_attention_forward.1} parent=11 // pred_fallthru
          _
        // Predicated region
        $region37: #{tag_self_attention_forward.1} parent=11 // pred_check
          %p320 = pneg %p195
        $region38: #{tag_self_attention_forward.1} parent=11 // pred_check_branch
          %322 = sbr.rel (%p320) target = $region40
        $region39: #{tag_self_attention_forward.1} parent=11 // pred_region
          _
        $region40: #{tag_self_attention_forward.1} parent=11 // pred_fallthru
          _
      $region12: #{tag_self_attention_forward.1} parent=5 // pred_fallthru
        _
      %p323 = scmp.lt.s32.totalorder %s22, 2
      // Predicated region
      $region41: #{tag_self_attention_forward.1} parent=5 // pred_check
        %p324 = pneg %p323
      $region42: #{tag_self_attention_forward.1} parent=5 // pred_check_branch
        %326 = sbr.rel (%p324) target = $region44
      $region43: #{tag_self_attention_forward.1} parent=5 // pred_region
        // Predicated region
        $region45: #{tag_self_attention_forward.1} parent=43 // pred_check
          %p327 = pneg %p42
        $region46: #{tag_self_attention_forward.1} parent=43 // pred_check_branch
          %329 = sbr.rel (%p327) target = $region48
        $region47: #{tag_self_attention_forward.1} parent=43 // pred_region
          %p330 = scmp.lt.s32.totalorder %s22, 1
          %s331 = scalar_select %p330, %s22, 1
          %s332 = smul.addr %s331, 8
          %s333 = scalar_lea.vmem %s0, %s332
        $region48: #{tag_self_attention_forward.1} parent=43 // pred_fallthru
          _
      $region44: #{tag_self_attention_forward.1} parent=5 // pred_fallthru
        _
      %p334 = scmp.le.s32.totalorder 1, %s22
      %p335 = scmp.lt.s32.totalorder %s22, 3
      %p336 = pnand %p334, %p335
      %p337 = pneg %p336
      // Predicated region
      $region49: #{tag_self_attention_forward.1} parent=5 // pred_check
        _
      $region50: #{tag_self_attention_forward.1} parent=5 // pred_check_branch
        %339 = sbr.rel (%p336) target = $region52
      $region51: #{tag_self_attention_forward.1} parent=5 // pred_region
        %s340 = ssub.s32 %s22, 1
        // Predicated region
        $region53: #{tag_self_attention_forward.1} parent=51 // pred_check
          %p341 = pneg %p69
        $region54: #{tag_self_attention_forward.1} parent=51 // pred_check_branch
          %343 = sbr.rel (%p341) target = $region56
        $region55: #{tag_self_attention_forward.1} parent=51 // pred_region
          %344 = dma.done [#allocation3], 256
        $region56: #{tag_self_attention_forward.1} parent=51 // pred_fallthru
          _
        // Predicated region
        $region57: #{tag_self_attention_forward.1} parent=51 // pred_check
          %p345 = pneg %p90
        $region58: #{tag_self_attention_forward.1} parent=51 // pred_check_branch
          %347 = sbr.rel (%p345) target = $region60
        $region59: #{tag_self_attention_forward.1} parent=51 // pred_region
          %348 = dma.done [#allocation6], 512
        $region60: #{tag_self_attention_forward.1} parent=51 // pred_fallthru
          _
        // Predicated region
        $region61: #{tag_self_attention_forward.1} parent=51 // pred_check
          %p349 = pneg %p111
        $region62: #{tag_self_attention_forward.1} parent=51 // pred_check_branch
          %351 = sbr.rel (%p349) target = $region64
        $region63: #{tag_self_attention_forward.1} parent=51 // pred_region
          %352 = dma.done [#allocation6], 512
        $region64: #{tag_self_attention_forward.1} parent=51 // pred_fallthru
          _
        // Predicated region
        $region65: #{tag_self_attention_forward.1} parent=51 // pred_check
          %p353 = pneg %p132
        $region66: #{tag_self_attention_forward.1} parent=51 // pred_check_branch
          %355 = sbr.rel (%p353) target = $region68
        $region67: #{tag_self_attention_forward.1} parent=51 // pred_region
          %356 = dma.done [#allocation9], 512
        $region68: #{tag_self_attention_forward.1} parent=51 // pred_fallthru
          _
        %p357 = scmp.lt.s32.totalorder %s27, 1
        %s358 = scalar_select %p357, %s27, 1
        %s359 = smul.addr %s358, 8
        %s360 = scalar_lea.vmem %s0, %s359
        %p361 = pneg %p48
        %p362 = pneg %p45
        %p363 = pneg %p69
        %p364 = pneg %p66
        %p365 = pneg %p90
        %p366 = pneg %p87
        %p367 = pneg %p111
        %p368 = pneg %p108
        %p369 = pneg %p132
        %p370 = pneg %p129
        %p371 = pneg %p153
        %p372 = pneg %p150
        %p373 = pneg %p174
        %p374 = pneg %p171
        %p375 = pneg %p195
        %p376 = pneg %p192
        %p377 = pneg %p221
        %p378 = pneg %p218
        %s379 = sand.u32 %s208, 1
        %s380 = scalar_lea.sflag [#allocation4], %s379
        %s381 = sand.u32 %s208, 1
        %s382 = scalar_lea.vmem [#allocation10], %s381
        %p383 = pneg %p247
        %p384 = pneg %p244
        %p385 = scmp.lt.s32.totalorder %s27, 1
        %s386 = scalar_select %p385, %s27, 1
        %s387 = smul.addr %s386, 8
        %s388 = scalar_lea.vmem %s9, %s387
        %p389 = scmp.lt.s32.totalorder %s27, 1
        %s390 = scalar_select %p389, %s27, 1
        %s391 = smul.addr %s390, 8
        %s392 = scalar_lea.vmem %s0, %s391
        %p393 = scmp.lt.s32.totalorder %s27, 1
        %s394 = scalar_select %p393, %s27, 1
        %s395 = smul.addr %s394, 8
        %s396 = scalar_lea.vmem %s9, %s395
        %v397 = vld [vmem:[%s392] sm:$0xff]
        %v398 = vlaneseq
        %v399 = vand.u32 %v398, 127
        %400 = vset.pattern.permute.xlu0 0
        %401 = vperm.xlu0 %400, %v397
        %v402 = vpop.permute.xlu0 %401
        %vm403 = vcmp.eq.s32.totalorder %v402, %v399
        %v404 = vsel %vm403, 1, 0
        %v405 = vcvt.s32.f32 %v404
        %v406 = vld [vmem:[#allocation2] sm:$0xff]
        %v407 = vld [vmem:[#allocation2 + $0x8] sm:$0xff]
        %vm408 = vcmask 130048
        %v410 = vsel %vm408, %v405, 0
        %412 = vmatprep.subr.mxu0 0.0
        %413 = vmatpush1.msra.mxu0 0.0
        %414 = vmatprep.subr.mxu0 0.0
        %415 = vmatpush1.msra.mxu0 0.0
        %416 = vmatprep.subr.mxu0 0.0
        %417 = vmatpush1.msra.mxu0 0.0
        %418 = vmatprep.subr.mxu0 0.0
        %419 = vmatpush1.msra.mxu0 0.0
        %420 = vmatprep.subr.mxu0 0.0
        %421 = vmatpush1.msra.mxu0 0.0
        %422 = vmatprep.subr.mxu0 0.0
        %423 = vmatpush1.msra.mxu0 0.0
        %424 = vmatprep.subr.mxu0 0.0
        %425 = vmatpush1.msra.mxu0 0.0
        %426 = vmatprep.subr.mxu0 0.0
        %427 = vmatpush1.msra.mxu0 0.0
        %428 = vmatprep.subr.mxu0 0.0
        %429 = vmatpush1.msra.mxu0 0.0
        %430 = vmatprep.subr.mxu0 0.0
        %431 = vmatpush1.msra.mxu0 0.0
        %432 = vmatprep.subr.mxu0 0.0
        %433 = vmatpush1.msra.mxu0 0.0
        %434 = vmatprep.subr.mxu0 0.0
        %435 = vmatpush1.msra.mxu0 0.0
        %436 = vmatprep.subr.mxu0 0.0
        %437 = vmatpush1.msra.mxu0 0.0
        %438 = vmatprep.subr.mxu0 0.0
        %439 = vmatpush1.msra.mxu0 0.0
        %440 = vmatprep.subr.mxu0 0.0
        %441 = vmatpush1.msra.mxu0 %v407
        %442 = vmatprep.subr.mxu0 0.0
        %443 = vmatpush1.msra.mxu0 %v406
        %444 = vmatprep.subr.mxu0 0.0
        %445 = vmatpush2.msra.mxu0 0.0
        %446 = vmatprep.subr.mxu0 0.0
        %447 = vmatpush2.msra.mxu0 0.0
        %448 = vmatprep.subr.mxu0 0.0
        %449 = vmatpush2.msra.mxu0 0.0
        %450 = vmatprep.subr.mxu0 0.0
        %451 = vmatpush2.msra.mxu0 0.0
        %452 = vmatprep.subr.mxu0 0.0
        %453 = vmatpush2.msra.mxu0 0.0
        %454 = vmatprep.subr.mxu0 0.0
        %455 = vmatpush2.msra.mxu0 0.0
        %456 = vmatprep.subr.mxu0 0.0
        %457 = vmatpush2.msra.mxu0 0.0
        %458 = vmatprep.subr.mxu0 0.0
        %459 = vmatpush2.msra.mxu0 0.0
        %460 = vmatprep.subr.mxu0 0.0
        %461 = vmatpush2.msra.mxu0 0.0
        %462 = vmatprep.subr.mxu0 0.0
        %463 = vmatpush2.msra.mxu0 0.0
        %464 = vmatprep.subr.mxu0 0.0
        %465 = vmatpush2.msra.mxu0 0.0
        %466 = vmatprep.subr.mxu0 0.0
        %467 = vmatpush2.msra.mxu0 0.0
        %468 = vmatprep.subr.mxu0 0.0
        %469 = vmatpush2.msra.mxu0 0.0
        %470 = vmatprep.subr.mxu0 0.0
        %471 = vmatpush2.msra.mxu0 0.0
        %472 = vmatprep.subr.mxu0 0.0
        %473 = vmatpush2.msra.mxu0 0.0
        %474 = vmatprep.subr.mxu0 0.0
        %475 = vmatpush2.msra.mxu0 0.0
        %476 = vmatprep.mubr.f32.mxu0 0.0
        %477 = vmatmul.mubr.f32.gmra.mxu0 %v410
        %v478 = vpop.f32.mrf.mxu0
        %v479 = vadd.f32 0.0, %v478
        %v480 = vpop.f32.mrf.mxu0
        %481 = vdwg.mxu0
        %v482 = vld [vmem:[#allocation5] sm:$0xff]
        %v483 = vld [vmem:[#allocation5 + $0x8] sm:$0xff]
        %v484 = vld [vmem:[#allocation5 + $0x10] sm:$0xff]
        %v485 = vld [vmem:[#allocation5 + $0x18] sm:$0xff]
        %vm486 = vcmask 261120
        %v488 = vsel %vm486, %v479, 0
        %v491 = vsel %vm486, %v482, 0
        %v494 = vsel %vm486, %v483, 0
        %v497 = vsel %vm486, %v484, 0
        %v500 = vsel %vm486, %v485, 0
        %502 = vmatprep.subr.mxu0 0.0
        %503 = vmatpush1.xpose.msra.mxu0 0.0
        %504 = vmatprep.subr.mxu0 0.0
        %505 = vmatpush1.xpose.msra.mxu0 0.0
        %506 = vmatprep.subr.mxu0 0.0
        %507 = vmatpush1.xpose.msra.mxu0 0.0
        %508 = vmatprep.subr.mxu0 0.0
        %509 = vmatpush1.xpose.msra.mxu0 0.0
        %510 = vmatprep.subr.mxu0 0.0
        %511 = vmatpush1.xpose.msra.mxu0 0.0
        %512 = vmatprep.subr.mxu0 0.0
        %513 = vmatpush1.xpose.msra.mxu0 0.0
        %514 = vmatprep.subr.mxu0 0.0
        %515 = vmatpush1.xpose.msra.mxu0 0.0
        %516 = vmatprep.subr.mxu0 0.0
        %517 = vmatpush1.xpose.msra.mxu0 0.0
        %518 = vmatprep.subr.mxu0 0.0
        %519 = vmatpush1.xpose.msra.mxu0 0.0
        %520 = vmatprep.subr.mxu0 0.0
        %521 = vmatpush1.xpose.msra.mxu0 0.0
        %522 = vmatprep.subr.mxu0 0.0
        %523 = vmatpush1.xpose.msra.mxu0 0.0
        %524 = vmatprep.subr.mxu0 0.0
        %525 = vmatpush1.xpose.msra.mxu0 0.0
        %526 = vmatprep.subr.mxu0 0.0
        %527 = vmatpush1.xpose.msra.mxu0 %v500
        %528 = vmatprep.subr.mxu0 0.0
        %529 = vmatpush1.xpose.msra.mxu0 %v497
        %530 = vmatprep.subr.mxu0 0.0
        %531 = vmatpush1.xpose.msra.mxu0 %v494
        %532 = vmatprep.subr.mxu0 0.0
        %533 = vmatpush1.xpose.msra.mxu0 %v491
        %534 = vmatprep.subr.mxu0 0.0
        %535 = vmatpush2.xpose.msra.mxu0 0.0
        %536 = vmatprep.subr.mxu0 0.0
        %537 = vmatpush2.xpose.msra.mxu0 0.0
        %538 = vmatprep.subr.mxu0 0.0
        %539 = vmatpush2.xpose.msra.mxu0 0.0
        %540 = vmatprep.subr.mxu0 0.0
        %541 = vmatpush2.xpose.msra.mxu0 0.0
        %542 = vmatprep.subr.mxu0 0.0
        %543 = vmatpush2.xpose.msra.mxu0 0.0
        %544 = vmatprep.subr.mxu0 0.0
        %545 = vmatpush2.xpose.msra.mxu0 0.0
        %546 = vmatprep.subr.mxu0 0.0
        %547 = vmatpush2.xpose.msra.mxu0 0.0
        %548 = vmatprep.subr.mxu0 0.0
        %549 = vmatpush2.xpose.msra.mxu0 0.0
        %550 = vmatprep.subr.mxu0 0.0
        %551 = vmatpush2.xpose.msra.mxu0 0.0
        %552 = vmatprep.subr.mxu0 0.0
        %553 = vmatpush2.xpose.msra.mxu0 0.0
        %554 = vmatprep.subr.mxu0 0.0
        %555 = vmatpush2.xpose.msra.mxu0 0.0
        %556 = vmatprep.subr.mxu0 0.0
        %557 = vmatpush2.xpose.msra.mxu0 0.0
        %558 = vmatprep.subr.mxu0 0.0
        %559 = vmatpush2.xpose.msra.mxu0 0.0
        %560 = vmatprep.subr.mxu0 0.0
        %561 = vmatpush2.xpose.msra.mxu0 0.0
        %562 = vmatprep.subr.mxu0 0.0
        %563 = vmatpush2.xpose.msra.mxu0 0.0
        %564 = vmatprep.subr.mxu0 0.0
        %565 = vmatpush2.xpose.msra.mxu0 0.0
        %566 = vmatprep.mubr.f32.mxu0 0.0
        %567 = vmatmul.mubr.f32.gmra.mxu0 %v488
        %v568 = vpop.f32.mrf.mxu0
        %v569 = vadd.f32 0.0, %v568
        %v570 = vpop.f32.mrf.mxu0
        %571 = vdwg.mxu0
        %v572 = vld [vmem:[#allocation7] sm:$0xff]
        %v573 = vld [vmem:[#allocation7 + $0x8] sm:$0xff]
        %v574 = vld [vmem:[#allocation7 + $0x10] sm:$0xff]
        %v575 = vld [vmem:[#allocation7 + $0x18] sm:$0xff]
        %v577 = vsel %vm486, %v572, 0
        %v580 = vsel %vm486, %v573, 0
        %v583 = vsel %vm486, %v574, 0
        %v586 = vsel %vm486, %v575, 0
        %588 = vmatprep.subr.mxu0 0.0
        %589 = vmatpush1.xpose.msra.mxu0 0.0
        %590 = vmatprep.subr.mxu0 0.0
        %591 = vmatpush1.xpose.msra.mxu0 0.0
        %592 = vmatprep.subr.mxu0 0.0
        %593 = vmatpush1.xpose.msra.mxu0 0.0
        %594 = vmatprep.subr.mxu0 0.0
        %595 = vmatpush1.xpose.msra.mxu0 0.0
        %596 = vmatprep.subr.mxu0 0.0
        %597 = vmatpush1.xpose.msra.mxu0 0.0
        %598 = vmatprep.subr.mxu0 0.0
        %599 = vmatpush1.xpose.msra.mxu0 0.0
        %600 = vmatprep.subr.mxu0 0.0
        %601 = vmatpush1.xpose.msra.mxu0 0.0
        %602 = vmatprep.subr.mxu0 0.0
        %603 = vmatpush1.xpose.msra.mxu0 0.0
        %604 = vmatprep.subr.mxu0 0.0
        %605 = vmatpush1.xpose.msra.mxu0 0.0
        %606 = vmatprep.subr.mxu0 0.0
        %607 = vmatpush1.xpose.msra.mxu0 0.0
        %608 = vmatprep.subr.mxu0 0.0
        %609 = vmatpush1.xpose.msra.mxu0 0.0
        %610 = vmatprep.subr.mxu0 0.0
        %611 = vmatpush1.xpose.msra.mxu0 0.0
        %612 = vmatprep.subr.mxu0 0.0
        %613 = vmatpush1.xpose.msra.mxu0 %v586
        %614 = vmatprep.subr.mxu0 0.0
        %615 = vmatpush1.xpose.msra.mxu0 %v583
        %616 = vmatprep.subr.mxu0 0.0
        %617 = vmatpush1.xpose.msra.mxu0 %v580
        %618 = vmatprep.subr.mxu0 0.0
        %619 = vmatpush1.xpose.msra.mxu0 %v577
        %620 = vmatprep.subr.mxu0 0.0
        %621 = vmatpush2.xpose.msra.mxu0 0.0
        %622 = vmatprep.subr.mxu0 0.0
        %623 = vmatpush2.xpose.msra.mxu0 0.0
        %624 = vmatprep.subr.mxu0 0.0
        %625 = vmatpush2.xpose.msra.mxu0 0.0
        %626 = vmatprep.subr.mxu0 0.0
        %627 = vmatpush2.xpose.msra.mxu0 0.0
        %628 = vmatprep.subr.mxu0 0.0
        %629 = vmatpush2.xpose.msra.mxu0 0.0
        %630 = vmatprep.subr.mxu0 0.0
        %631 = vmatpush2.xpose.msra.mxu0 0.0
        %632 = vmatprep.subr.mxu0 0.0
        %633 = vmatpush2.xpose.msra.mxu0 0.0
        %634 = vmatprep.subr.mxu0 0.0
        %635 = vmatpush2.xpose.msra.mxu0 0.0
        %636 = vmatprep.subr.mxu0 0.0
        %637 = vmatpush2.xpose.msra.mxu0 0.0
        %638 = vmatprep.subr.mxu0 0.0
        %639 = vmatpush2.xpose.msra.mxu0 0.0
        %640 = vmatprep.subr.mxu0 0.0
        %641 = vmatpush2.xpose.msra.mxu0 0.0
        %642 = vmatprep.subr.mxu0 0.0
        %643 = vmatpush2.xpose.msra.mxu0 0.0
        %644 = vmatprep.subr.mxu0 0.0
        %645 = vmatpush2.xpose.msra.mxu0 0.0
        %646 = vmatprep.subr.mxu0 0.0
        %647 = vmatpush2.xpose.msra.mxu0 0.0
        %648 = vmatprep.subr.mxu0 0.0
        %649 = vmatpush2.xpose.msra.mxu0 0.0
        %650 = vmatprep.subr.mxu0 0.0
        %651 = vmatpush2.xpose.msra.mxu0 0.0
        %652 = vmatprep.mubr.f32.mxu0 0.0
        %653 = vmatmul.mubr.f32.gmra.mxu0 %v488
        %v654 = vpop.f32.mrf.mxu0
        %v655 = vadd.f32 0.0, %v654
        %v656 = vpop.f32.mrf.mxu0
        %657 = vdwg.mxu0
        %v658 = vld [vmem:[#allocation8] sm:$0xff]
        %v659 = vld [vmem:[#allocation8 + $0x8] sm:$0xff]
        %v660 = vld [vmem:[#allocation8 + $0x10] sm:$0xff]
        %v661 = vld [vmem:[#allocation8 + $0x18] sm:$0xff]
        %v663 = vsel %vm486, %v658, 0
        %v666 = vsel %vm486, %v659, 0
        %v669 = vsel %vm486, %v660, 0
        %v672 = vsel %vm486, %v661, 0
        %674 = vmatprep.subr.mxu0 0.0
        %675 = vmatpush1.xpose.msra.mxu0 0.0
        %676 = vmatprep.subr.mxu0 0.0
        %677 = vmatpush1.xpose.msra.mxu0 0.0
        %678 = vmatprep.subr.mxu0 0.0
        %679 = vmatpush1.xpose.msra.mxu0 0.0
        %680 = vmatprep.subr.mxu0 0.0
        %681 = vmatpush1.xpose.msra.mxu0 0.0
        %682 = vmatprep.subr.mxu0 0.0
        %683 = vmatpush1.xpose.msra.mxu0 0.0
        %684 = vmatprep.subr.mxu0 0.0
        %685 = vmatpush1.xpose.msra.mxu0 0.0
        %686 = vmatprep.subr.mxu0 0.0
        %687 = vmatpush1.xpose.msra.mxu0 0.0
        %688 = vmatprep.subr.mxu0 0.0
        %689 = vmatpush1.xpose.msra.mxu0 0.0
        %690 = vmatprep.subr.mxu0 0.0
        %691 = vmatpush1.xpose.msra.mxu0 0.0
        %692 = vmatprep.subr.mxu0 0.0
        %693 = vmatpush1.xpose.msra.mxu0 0.0
        %694 = vmatprep.subr.mxu0 0.0
        %695 = vmatpush1.xpose.msra.mxu0 0.0
        %696 = vmatprep.subr.mxu0 0.0
        %697 = vmatpush1.xpose.msra.mxu0 0.0
        %698 = vmatprep.subr.mxu0 0.0
        %699 = vmatpush1.xpose.msra.mxu0 %v672
        %700 = vmatprep.subr.mxu0 0.0
        %701 = vmatpush1.xpose.msra.mxu0 %v669
        %702 = vmatprep.subr.mxu0 0.0
        %703 = vmatpush1.xpose.msra.mxu0 %v666
        %704 = vmatprep.subr.mxu0 0.0
        %705 = vmatpush1.xpose.msra.mxu0 %v663
        %706 = vmatprep.subr.mxu0 0.0
        %707 = vmatpush2.xpose.msra.mxu0 0.0
        %708 = vmatprep.subr.mxu0 0.0
        %709 = vmatpush2.xpose.msra.mxu0 0.0
        %710 = vmatprep.subr.mxu0 0.0
        %711 = vmatpush2.xpose.msra.mxu0 0.0
        %712 = vmatprep.subr.mxu0 0.0
        %713 = vmatpush2.xpose.msra.mxu0 0.0
        %714 = vmatprep.subr.mxu0 0.0
        %715 = vmatpush2.xpose.msra.mxu0 0.0
        %716 = vmatprep.subr.mxu0 0.0
        %717 = vmatpush2.xpose.msra.mxu0 0.0
        %718 = vmatprep.subr.mxu0 0.0
        %719 = vmatpush2.xpose.msra.mxu0 0.0
        %720 = vmatprep.subr.mxu0 0.0
        %721 = vmatpush2.xpose.msra.mxu0 0.0
        %722 = vmatprep.subr.mxu0 0.0
        %723 = vmatpush2.xpose.msra.mxu0 0.0
        %724 = vmatprep.subr.mxu0 0.0
        %725 = vmatpush2.xpose.msra.mxu0 0.0
        %726 = vmatprep.subr.mxu0 0.0
        %727 = vmatpush2.xpose.msra.mxu0 0.0
        %728 = vmatprep.subr.mxu0 0.0
        %729 = vmatpush2.xpose.msra.mxu0 0.0
        %730 = vmatprep.subr.mxu0 0.0
        %731 = vmatpush2.xpose.msra.mxu0 0.0
        %732 = vmatprep.subr.mxu0 0.0
        %733 = vmatpush2.xpose.msra.mxu0 0.0
        %734 = vmatprep.subr.mxu0 0.0
        %735 = vmatpush2.xpose.msra.mxu0 0.0
        %736 = vmatprep.subr.mxu0 0.0
        %737 = vmatpush2.xpose.msra.mxu0 0.0
        %738 = vmatprep.mubr.f32.mxu0 0.0
        %739 = vmatmul.mubr.f32.gmra.mxu0 %v488
        %v740 = vpop.f32.mrf.mxu0
        %v741 = vadd.f32 0.0, %v740
        %v742 = vpop.f32.mrf.mxu0
        %743 = vdwg.mxu0
        %v744 = vmul.f32 %v569, 0.35355338
        %vm745 = vcmask 64512
        %v747 = vsel %vm745, %v744, 0
        %v750 = vsel %vm745, %v655, 0
        %752 = vmatprep.subr.mxu0 0.0
        %753 = vmatpush1.xpose.msra.mxu0 0.0
        %754 = vmatprep.subr.mxu0 0.0
        %755 = vmatpush1.xpose.msra.mxu0 0.0
        %756 = vmatprep.subr.mxu0 0.0
        %757 = vmatpush1.xpose.msra.mxu0 0.0
        %758 = vmatprep.subr.mxu0 0.0
        %759 = vmatpush1.xpose.msra.mxu0 0.0
        %760 = vmatprep.subr.mxu0 0.0
        %761 = vmatpush1.xpose.msra.mxu0 0.0
        %762 = vmatprep.subr.mxu0 0.0
        %763 = vmatpush1.xpose.msra.mxu0 0.0
        %764 = vmatprep.subr.mxu0 0.0
        %765 = vmatpush1.xpose.msra.mxu0 0.0
        %766 = vmatprep.subr.mxu0 0.0
        %767 = vmatpush1.xpose.msra.mxu0 0.0
        %768 = vmatprep.subr.mxu0 0.0
        %769 = vmatpush1.xpose.msra.mxu0 0.0
        %770 = vmatprep.subr.mxu0 0.0
        %771 = vmatpush1.xpose.msra.mxu0 0.0
        %772 = vmatprep.subr.mxu0 0.0
        %773 = vmatpush1.xpose.msra.mxu0 0.0
        %774 = vmatprep.subr.mxu0 0.0
        %775 = vmatpush1.xpose.msra.mxu0 0.0
        %776 = vmatprep.subr.mxu0 0.0
        %777 = vmatpush1.xpose.msra.mxu0 0.0
        %778 = vmatprep.subr.mxu0 0.0
        %779 = vmatpush1.xpose.msra.mxu0 0.0
        %780 = vmatprep.subr.mxu0 0.0
        %781 = vmatpush1.xpose.msra.mxu0 0.0
        %782 = vmatprep.subr.mxu0 0.0
        %783 = vmatpush1.xpose.msra.mxu0 %v750
        %784 = vmatprep.subr.mxu0 0.0
        %785 = vmatpush2.xpose.msra.mxu0 0.0
        %786 = vmatprep.subr.mxu0 0.0
        %787 = vmatpush2.xpose.msra.mxu0 0.0
        %788 = vmatprep.subr.mxu0 0.0
        %789 = vmatpush2.xpose.msra.mxu0 0.0
        %790 = vmatprep.subr.mxu0 0.0
        %791 = vmatpush2.xpose.msra.mxu0 0.0
        %792 = vmatprep.subr.mxu0 0.0
        %793 = vmatpush2.xpose.msra.mxu0 0.0
        %794 = vmatprep.subr.mxu0 0.0
        %795 = vmatpush2.xpose.msra.mxu0 0.0
        %796 = vmatprep.subr.mxu0 0.0
        %797 = vmatpush2.xpose.msra.mxu0 0.0
        %798 = vmatprep.subr.mxu0 0.0
        %799 = vmatpush2.xpose.msra.mxu0 0.0
        %800 = vmatprep.subr.mxu0 0.0
        %801 = vmatpush2.xpose.msra.mxu0 0.0
        %802 = vmatprep.subr.mxu0 0.0
        %803 = vmatpush2.xpose.msra.mxu0 0.0
        %804 = vmatprep.subr.mxu0 0.0
        %805 = vmatpush2.xpose.msra.mxu0 0.0
        %806 = vmatprep.subr.mxu0 0.0
        %807 = vmatpush2.xpose.msra.mxu0 0.0
        %808 = vmatprep.subr.mxu0 0.0
        %809 = vmatpush2.xpose.msra.mxu0 0.0
        %810 = vmatprep.subr.mxu0 0.0
        %811 = vmatpush2.xpose.msra.mxu0 0.0
        %812 = vmatprep.subr.mxu0 0.0
        %813 = vmatpush2.xpose.msra.mxu0 0.0
        %814 = vmatprep.subr.mxu0 0.0
        %815 = vmatpush2.xpose.msra.mxu0 0.0
        %816 = vmatprep.mubr.f32.mxu0 0.0
        %817 = vmatmul.mubr.f32.gmra.mxu0 %v747
        %v818 = vpop.f32.mrf.mxu0
        %v819 = vadd.f32 0.0, %v818
        %v820 = vpop.f32.mrf.mxu0
        %821 = vdwg.mxu0
        %v822 = vsel %vm745, %v819, -inf
        %823 = vmax.xlane.f32.xlu0 %v822
        %v824 = vpop.xlane.xlu0 %823
        %v825 = vsub.f32 %v819, %v824
        %v826 = vmul.f32 %v825, 1.442695
        %v827 = vpow.pop %v826
        %v828 = vsel %vm745, %v827, 0.0
        %829 = vadd.xlane.f32.xlu0 %v828
        %v830 = vpop.xlane.xlu0 %829
        %v831 = vrcp.pop %v830
        %v832 = vmul.f32 %v827, %v831
        %v834 = vsel %vm745, %v832, 0
        %836 = vmatprep.subr.mxu0 0.0
        %837 = vmatpush1.msra.mxu0 0.0
        %838 = vmatprep.subr.mxu0 0.0
        %839 = vmatpush1.msra.mxu0 0.0
        %840 = vmatprep.subr.mxu0 0.0
        %841 = vmatpush1.msra.mxu0 0.0
        %842 = vmatprep.subr.mxu0 0.0
        %843 = vmatpush1.msra.mxu0 0.0
        %844 = vmatprep.subr.mxu0 0.0
        %845 = vmatpush1.msra.mxu0 0.0
        %846 = vmatprep.subr.mxu0 0.0
        %847 = vmatpush1.msra.mxu0 0.0
        %848 = vmatprep.subr.mxu0 0.0
        %849 = vmatpush1.msra.mxu0 0.0
        %850 = vmatprep.subr.mxu0 0.0
        %851 = vmatpush1.msra.mxu0 0.0
        %852 = vmatprep.subr.mxu0 0.0
        %853 = vmatpush1.msra.mxu0 0.0
        %854 = vmatprep.subr.mxu0 0.0
        %855 = vmatpush1.msra.mxu0 0.0
        %856 = vmatprep.subr.mxu0 0.0
        %857 = vmatpush1.msra.mxu0 0.0
        %858 = vmatprep.subr.mxu0 0.0
        %859 = vmatpush1.msra.mxu0 0.0
        %860 = vmatprep.subr.mxu0 0.0
        %861 = vmatpush1.msra.mxu0 0.0
        %862 = vmatprep.subr.mxu0 0.0
        %863 = vmatpush1.msra.mxu0 0.0
        %864 = vmatprep.subr.mxu0 0.0
        %865 = vmatpush1.msra.mxu0 0.0
        %866 = vmatprep.subr.mxu0 0.0
        %867 = vmatpush1.msra.mxu0 %v741
        %868 = vmatprep.subr.mxu0 0.0
        %869 = vmatpush2.msra.mxu0 0.0
        %870 = vmatprep.subr.mxu0 0.0
        %871 = vmatpush2.msra.mxu0 0.0
        %872 = vmatprep.subr.mxu0 0.0
        %873 = vmatpush2.msra.mxu0 0.0
        %874 = vmatprep.subr.mxu0 0.0
        %875 = vmatpush2.msra.mxu0 0.0
        %876 = vmatprep.subr.mxu0 0.0
        %877 = vmatpush2.msra.mxu0 0.0
        %878 = vmatprep.subr.mxu0 0.0
        %879 = vmatpush2.msra.mxu0 0.0
        %880 = vmatprep.subr.mxu0 0.0
        %881 = vmatpush2.msra.mxu0 0.0
        %882 = vmatprep.subr.mxu0 0.0
        %883 = vmatpush2.msra.mxu0 0.0
        %884 = vmatprep.subr.mxu0 0.0
        %885 = vmatpush2.msra.mxu0 0.0
        %886 = vmatprep.subr.mxu0 0.0
        %887 = vmatpush2.msra.mxu0 0.0
        %888 = vmatprep.subr.mxu0 0.0
        %889 = vmatpush2.msra.mxu0 0.0
        %890 = vmatprep.subr.mxu0 0.0
        %891 = vmatpush2.msra.mxu0 0.0
        %892 = vmatprep.subr.mxu0 0.0
        %893 = vmatpush2.msra.mxu0 0.0
        %894 = vmatprep.subr.mxu0 0.0
        %895 = vmatpush2.msra.mxu0 0.0
        %896 = vmatprep.subr.mxu0 0.0
        %897 = vmatpush2.msra.mxu0 0.0
        %898 = vmatprep.subr.mxu0 0.0
        %899 = vmatpush2.msra.mxu0 0.0
        %900 = vmatprep.mubr.f32.mxu0 0.0
        %901 = vmatmul.mubr.f32.gmra.mxu0 %v834
        %v902 = vpop.f32.mrf.mxu0
        %v903 = vadd.f32 0.0, %v902
        %v904 = vpop.f32.mrf.mxu0
        %905 = vdwg.mxu0
        %v906 = vsel %vm745, %v903, 0.0
        %v907 = vrot.slane %v906, 4
        %v908 = vadd.f32 %v906, %v907
        %v909 = vrot.slane %v908, 2
        %v910 = vadd.f32 %v908, %v909
        %v911 = vrot.slane %v910, 1
        %v912 = vadd.f32 %v910, %v911
        %913 = vrot.lane.b32.xlu0 %v744, 120
        %v914 = vpop.permute.xlu0 %913
        %915 = vrot.lane.b32.xlu0 %v655, 120
        %v916 = vpop.permute.xlu0 %915
        %v917 = vsel %vm745, %v914, 0
        %v919 = vsel %vm745, %v916, 0
        %921 = vmatprep.subr.mxu0 0.0
        %922 = vmatpush1.xpose.msra.mxu0 0.0
        %923 = vmatprep.subr.mxu0 0.0
        %924 = vmatpush1.xpose.msra.mxu0 0.0
        %925 = vmatprep.subr.mxu0 0.0
        %926 = vmatpush1.xpose.msra.mxu0 0.0
        %927 = vmatprep.subr.mxu0 0.0
        %928 = vmatpush1.xpose.msra.mxu0 0.0
        %929 = vmatprep.subr.mxu0 0.0
        %930 = vmatpush1.xpose.msra.mxu0 0.0
        %931 = vmatprep.subr.mxu0 0.0
        %932 = vmatpush1.xpose.msra.mxu0 0.0
        %933 = vmatprep.subr.mxu0 0.0
        %934 = vmatpush1.xpose.msra.mxu0 0.0
        %935 = vmatprep.subr.mxu0 0.0
        %936 = vmatpush1.xpose.msra.mxu0 0.0
        %937 = vmatprep.subr.mxu0 0.0
        %938 = vmatpush1.xpose.msra.mxu0 0.0
        %939 = vmatprep.subr.mxu0 0.0
        %940 = vmatpush1.xpose.msra.mxu0 0.0
        %941 = vmatprep.subr.mxu0 0.0
        %942 = vmatpush1.xpose.msra.mxu0 0.0
        %943 = vmatprep.subr.mxu0 0.0
        %944 = vmatpush1.xpose.msra.mxu0 0.0
        %945 = vmatprep.subr.mxu0 0.0
        %946 = vmatpush1.xpose.msra.mxu0 0.0
        %947 = vmatprep.subr.mxu0 0.0
        %948 = vmatpush1.xpose.msra.mxu0 0.0
        %949 = vmatprep.subr.mxu0 0.0
        %950 = vmatpush1.xpose.msra.mxu0 0.0
        %951 = vmatprep.subr.mxu0 0.0
        %952 = vmatpush1.xpose.msra.mxu0 %v919
        %953 = vmatprep.subr.mxu0 0.0
        %954 = vmatpush2.xpose.msra.mxu0 0.0
        %955 = vmatprep.subr.mxu0 0.0
        %956 = vmatpush2.xpose.msra.mxu0 0.0
        %957 = vmatprep.subr.mxu0 0.0
        %958 = vmatpush2.xpose.msra.mxu0 0.0
        %959 = vmatprep.subr.mxu0 0.0
        %960 = vmatpush2.xpose.msra.mxu0 0.0
        %961 = vmatprep.subr.mxu0 0.0
        %962 = vmatpush2.xpose.msra.mxu0 0.0
        %963 = vmatprep.subr.mxu0 0.0
        %964 = vmatpush2.xpose.msra.mxu0 0.0
        %965 = vmatprep.subr.mxu0 0.0
        %966 = vmatpush2.xpose.msra.mxu0 0.0
        %967 = vmatprep.subr.mxu0 0.0
        %968 = vmatpush2.xpose.msra.mxu0 0.0
        %969 = vmatprep.subr.mxu0 0.0
        %970 = vmatpush2.xpose.msra.mxu0 0.0
        %971 = vmatprep.subr.mxu0 0.0
        %972 = vmatpush2.xpose.msra.mxu0 0.0
        %973 = vmatprep.subr.mxu0 0.0
        %974 = vmatpush2.xpose.msra.mxu0 0.0
        %975 = vmatprep.subr.mxu0 0.0
        %976 = vmatpush2.xpose.msra.mxu0 0.0
        %977 = vmatprep.subr.mxu0 0.0
        %978 = vmatpush2.xpose.msra.mxu0 0.0
        %979 = vmatprep.subr.mxu0 0.0
        %980 = vmatpush2.xpose.msra.mxu0 0.0
        %981 = vmatprep.subr.mxu0 0.0
        %982 = vmatpush2.xpose.msra.mxu0 0.0
        %983 = vmatprep.subr.mxu0 0.0
        %984 = vmatpush2.xpose.msra.mxu0 0.0
        %985 = vmatprep.mubr.f32.mxu0 0.0
        %986 = vmatmul.mubr.f32.gmra.mxu0 %v917
        %v987 = vpop.f32.mrf.mxu0
        %v988 = vadd.f32 0.0, %v987
        %v989 = vpop.f32.mrf.mxu0
        %990 = vdwg.mxu0
        %v991 = vsel %vm745, %v988, -inf
        %992 = vmax.xlane.f32.xlu0 %v991
        %v993 = vpop.xlane.xlu0 %992
        %v994 = vsub.f32 %v988, %v993
        %v995 = vmul.f32 %v994, 1.442695
        %v996 = vpow.pop %v995
        %v997 = vsel %vm745, %v996, 0.0
        %998 = vadd.xlane.f32.xlu0 %v997
        %v999 = vpop.xlane.xlu0 %998
        %v1000 = vrcp.pop %v999
        %v1001 = vmul.f32 %v996, %v1000
        %1003 = vrot.lane.b32.xlu0 %v741, 120
        %v1004 = vpop.permute.xlu0 %1003
        %v1007 = vsel %vm745, %v1001, 0
        %1009 = vmatprep.subr.mxu0 0.0
        %1010 = vmatpush1.msra.mxu0 0.0
        %1011 = vmatprep.subr.mxu0 0.0
        %1012 = vmatpush1.msra.mxu0 0.0
        %1013 = vmatprep.subr.mxu0 0.0
        %1014 = vmatpush1.msra.mxu0 0.0
        %1015 = vmatprep.subr.mxu0 0.0
        %1016 = vmatpush1.msra.mxu0 0.0
        %1017 = vmatprep.subr.mxu0 0.0
        %1018 = vmatpush1.msra.mxu0 0.0
        %1019 = vmatprep.subr.mxu0 0.0
        %1020 = vmatpush1.msra.mxu0 0.0
        %1021 = vmatprep.subr.mxu0 0.0
        %1022 = vmatpush1.msra.mxu0 0.0
        %1023 = vmatprep.subr.mxu0 0.0
        %1024 = vmatpush1.msra.mxu0 0.0
        %1025 = vmatprep.subr.mxu0 0.0
        %1026 = vmatpush1.msra.mxu0 0.0
        %1027 = vmatprep.subr.mxu0 0.0
        %1028 = vmatpush1.msra.mxu0 0.0
        %1029 = vmatprep.subr.mxu0 0.0
        %1030 = vmatpush1.msra.mxu0 0.0
        %1031 = vmatprep.subr.mxu0 0.0
        %1032 = vmatpush1.msra.mxu0 0.0
        %1033 = vmatprep.subr.mxu0 0.0
        %1034 = vmatpush1.msra.mxu0 0.0
        %1035 = vmatprep.subr.mxu0 0.0
        %1036 = vmatpush1.msra.mxu0 0.0
        %1037 = vmatprep.subr.mxu0 0.0
        %1038 = vmatpush1.msra.mxu0 0.0
        %1039 = vmatprep.subr.mxu0 0.0
        %1040 = vmatpush1.msra.mxu0 %v1004
        %1041 = vmatprep.subr.mxu0 0.0
        %1042 = vmatpush2.msra.mxu0 0.0
        %1043 = vmatprep.subr.mxu0 0.0
        %1044 = vmatpush2.msra.mxu0 0.0
        %1045 = vmatprep.subr.mxu0 0.0
        %1046 = vmatpush2.msra.mxu0 0.0
        %1047 = vmatprep.subr.mxu0 0.0
        %1048 = vmatpush2.msra.mxu0 0.0
        %1049 = vmatprep.subr.mxu0 0.0
        %1050 = vmatpush2.msra.mxu0 0.0
        %1051 = vmatprep.subr.mxu0 0.0
        %1052 = vmatpush2.msra.mxu0 0.0
        %1053 = vmatprep.subr.mxu0 0.0
        %1054 = vmatpush2.msra.mxu0 0.0
        %1055 = vmatprep.subr.mxu0 0.0
        %1056 = vmatpush2.msra.mxu0 0.0
        %1057 = vmatprep.subr.mxu0 0.0
        %1058 = vmatpush2.msra.mxu0 0.0
        %1059 = vmatprep.subr.mxu0 0.0
        %1060 = vmatpush2.msra.mxu0 0.0
        %1061 = vmatprep.subr.mxu0 0.0
        %1062 = vmatpush2.msra.mxu0 0.0
        %1063 = vmatprep.subr.mxu0 0.0
        %1064 = vmatpush2.msra.mxu0 0.0
        %1065 = vmatprep.subr.mxu0 0.0
        %1066 = vmatpush2.msra.mxu0 0.0
        %1067 = vmatprep.subr.mxu0 0.0
        %1068 = vmatpush2.msra.mxu0 0.0
        %1069 = vmatprep.subr.mxu0 0.0
        %1070 = vmatpush2.msra.mxu0 0.0
        %1071 = vmatprep.subr.mxu0 0.0
        %1072 = vmatpush2.msra.mxu0 0.0
        %1073 = vmatprep.mubr.f32.mxu0 0.0
        %1074 = vmatmul.mubr.f32.gmra.mxu0 %v1007
        %v1075 = vpop.f32.mrf.mxu0
        %v1076 = vadd.f32 0.0, %v1075
        %v1077 = vpop.f32.mrf.mxu0
        %1078 = vdwg.mxu0
        %v1079 = vsel %vm745, %v1076, 0.0
        %v1080 = vrot.slane %v1079, 4
        %v1081 = vadd.f32 %v1079, %v1080
        %v1082 = vrot.slane %v1081, 2
        %v1083 = vadd.f32 %v1081, %v1082
        %v1084 = vrot.slane %v1083, 1
        %v1085 = vadd.f32 %v1083, %v1084
        %1086 = vrot.lane.b32.xlu0 %v744, 112
        %v1087 = vpop.permute.xlu0 %1086
        %1088 = vrot.lane.b32.xlu0 %v655, 112
        %v1089 = vpop.permute.xlu0 %1088
        %v1090 = vsel %vm745, %v1087, 0
        %v1092 = vsel %vm745, %v1089, 0
        %1094 = vmatprep.subr.mxu0 0.0
        %1095 = vmatpush1.xpose.msra.mxu0 0.0
        %1096 = vmatprep.subr.mxu0 0.0
        %1097 = vmatpush1.xpose.msra.mxu0 0.0
        %1098 = vmatprep.subr.mxu0 0.0
        %1099 = vmatpush1.xpose.msra.mxu0 0.0
        %1100 = vmatprep.subr.mxu0 0.0
        %1101 = vmatpush1.xpose.msra.mxu0 0.0
        %1102 = vmatprep.subr.mxu0 0.0
        %1103 = vmatpush1.xpose.msra.mxu0 0.0
        %1104 = vmatprep.subr.mxu0 0.0
        %1105 = vmatpush1.xpose.msra.mxu0 0.0
        %1106 = vmatprep.subr.mxu0 0.0
        %1107 = vmatpush1.xpose.msra.mxu0 0.0
        %1108 = vmatprep.subr.mxu0 0.0
        %1109 = vmatpush1.xpose.msra.mxu0 0.0
        %1110 = vmatprep.subr.mxu0 0.0
        %1111 = vmatpush1.xpose.msra.mxu0 0.0
        %1112 = vmatprep.subr.mxu0 0.0
        %1113 = vmatpush1.xpose.msra.mxu0 0.0
        %1114 = vmatprep.subr.mxu0 0.0
        %1115 = vmatpush1.xpose.msra.mxu0 0.0
        %1116 = vmatprep.subr.mxu0 0.0
        %1117 = vmatpush1.xpose.msra.mxu0 0.0
        %1118 = vmatprep.subr.mxu0 0.0
        %1119 = vmatpush1.xpose.msra.mxu0 0.0
        %1120 = vmatprep.subr.mxu0 0.0
        %1121 = vmatpush1.xpose.msra.mxu0 0.0
        %1122 = vmatprep.subr.mxu0 0.0
        %1123 = vmatpush1.xpose.msra.mxu0 0.0
        %1124 = vmatprep.subr.mxu0 0.0
        %1125 = vmatpush1.xpose.msra.mxu0 %v1092
        %1126 = vmatprep.subr.mxu0 0.0
        %1127 = vmatpush2.xpose.msra.mxu0 0.0
        %1128 = vmatprep.subr.mxu0 0.0
        %1129 = vmatpush2.xpose.msra.mxu0 0.0
        %1130 = vmatprep.subr.mxu0 0.0
        %1131 = vmatpush2.xpose.msra.mxu0 0.0
        %1132 = vmatprep.subr.mxu0 0.0
        %1133 = vmatpush2.xpose.msra.mxu0 0.0
        %1134 = vmatprep.subr.mxu0 0.0
        %1135 = vmatpush2.xpose.msra.mxu0 0.0
        %1136 = vmatprep.subr.mxu0 0.0
        %1137 = vmatpush2.xpose.msra.mxu0 0.0
        %1138 = vmatprep.subr.mxu0 0.0
        %1139 = vmatpush2.xpose.msra.mxu0 0.0
        %1140 = vmatprep.subr.mxu0 0.0
        %1141 = vmatpush2.xpose.msra.mxu0 0.0
        %1142 = vmatprep.subr.mxu0 0.0
        %1143 = vmatpush2.xpose.msra.mxu0 0.0
        %1144 = vmatprep.subr.mxu0 0.0
        %1145 = vmatpush2.xpose.msra.mxu0 0.0
        %1146 = vmatprep.subr.mxu0 0.0
        %1147 = vmatpush2.xpose.msra.mxu0 0.0
        %1148 = vmatprep.subr.mxu0 0.0
        %1149 = vmatpush2.xpose.msra.mxu0 0.0
        %1150 = vmatprep.subr.mxu0 0.0
        %1151 = vmatpush2.xpose.msra.mxu0 0.0
        %1152 = vmatprep.subr.mxu0 0.0
        %1153 = vmatpush2.xpose.msra.mxu0 0.0
        %1154 = vmatprep.subr.mxu0 0.0
        %1155 = vmatpush2.xpose.msra.mxu0 0.0
        %1156 = vmatprep.subr.mxu0 0.0
        %1157 = vmatpush2.xpose.msra.mxu0 0.0
        %1158 = vmatprep.mubr.f32.mxu0 0.0
        %1159 = vmatmul.mubr.f32.gmra.mxu0 %v1090
        %v1160 = vpop.f32.mrf.mxu0
        %v1161 = vadd.f32 0.0, %v1160
        %v1162 = vpop.f32.mrf.mxu0
        %1163 = vdwg.mxu0
        %v1164 = vsel %vm745, %v1161, -inf
        %1165 = vmax.xlane.f32.xlu0 %v1164
        %v1166 = vpop.xlane.xlu0 %1165
        %v1167 = vsub.f32 %v1161, %v1166
        %v1168 = vmul.f32 %v1167, 1.442695
        %v1169 = vpow.pop %v1168
        %v1170 = vsel %vm745, %v1169, 0.0
        %1171 = vadd.xlane.f32.xlu0 %v1170
        %v1172 = vpop.xlane.xlu0 %1171
        %v1173 = vrcp.pop %v1172
        %v1174 = vmul.f32 %v1169, %v1173
        %1175 = vrot.lane.b32.xlu0 %v741, 112
        %v1176 = vpop.permute.xlu0 %1175
        %v1179 = vsel %vm745, %v1174, 0
        %1181 = vmatprep.subr.mxu0 0.0
        %1182 = vmatpush1.msra.mxu0 0.0
        %1183 = vmatprep.subr.mxu0 0.0
        %1184 = vmatpush1.msra.mxu0 0.0
        %1185 = vmatprep.subr.mxu0 0.0
        %1186 = vmatpush1.msra.mxu0 0.0
        %1187 = vmatprep.subr.mxu0 0.0
        %1188 = vmatpush1.msra.mxu0 0.0
        %1189 = vmatprep.subr.mxu0 0.0
        %1190 = vmatpush1.msra.mxu0 0.0
        %1191 = vmatprep.subr.mxu0 0.0
        %1192 = vmatpush1.msra.mxu0 0.0
        %1193 = vmatprep.subr.mxu0 0.0
        %1194 = vmatpush1.msra.mxu0 0.0
        %1195 = vmatprep.subr.mxu0 0.0
        %1196 = vmatpush1.msra.mxu0 0.0
        %1197 = vmatprep.subr.mxu0 0.0
        %1198 = vmatpush1.msra.mxu0 0.0
        %1199 = vmatprep.subr.mxu0 0.0
        %1200 = vmatpush1.msra.mxu0 0.0
        %1201 = vmatprep.subr.mxu0 0.0
        %1202 = vmatpush1.msra.mxu0 0.0
        %1203 = vmatprep.subr.mxu0 0.0
        %1204 = vmatpush1.msra.mxu0 0.0
        %1205 = vmatprep.subr.mxu0 0.0
        %1206 = vmatpush1.msra.mxu0 0.0
        %1207 = vmatprep.subr.mxu0 0.0
        %1208 = vmatpush1.msra.mxu0 0.0
        %1209 = vmatprep.subr.mxu0 0.0
        %1210 = vmatpush1.msra.mxu0 0.0
        %1211 = vmatprep.subr.mxu0 0.0
        %1212 = vmatpush1.msra.mxu0 %v1176
        %1213 = vmatprep.subr.mxu0 0.0
        %1214 = vmatpush2.msra.mxu0 0.0
        %1215 = vmatprep.subr.mxu0 0.0
        %1216 = vmatpush2.msra.mxu0 0.0
        %1217 = vmatprep.subr.mxu0 0.0
        %1218 = vmatpush2.msra.mxu0 0.0
        %1219 = vmatprep.subr.mxu0 0.0
        %1220 = vmatpush2.msra.mxu0 0.0
        %1221 = vmatprep.subr.mxu0 0.0
        %1222 = vmatpush2.msra.mxu0 0.0
        %1223 = vmatprep.subr.mxu0 0.0
        %1224 = vmatpush2.msra.mxu0 0.0
        %1225 = vmatprep.subr.mxu0 0.0
        %1226 = vmatpush2.msra.mxu0 0.0
        %1227 = vmatprep.subr.mxu0 0.0
        %1228 = vmatpush2.msra.mxu0 0.0
        %1229 = vmatprep.subr.mxu0 0.0
        %1230 = vmatpush2.msra.mxu0 0.0
        %1231 = vmatprep.subr.mxu0 0.0
        %1232 = vmatpush2.msra.mxu0 0.0
        %1233 = vmatprep.subr.mxu0 0.0
        %1234 = vmatpush2.msra.mxu0 0.0
        %1235 = vmatprep.subr.mxu0 0.0
        %1236 = vmatpush2.msra.mxu0 0.0
        %1237 = vmatprep.subr.mxu0 0.0
        %1238 = vmatpush2.msra.mxu0 0.0
        %1239 = vmatprep.subr.mxu0 0.0
        %1240 = vmatpush2.msra.mxu0 0.0
        %1241 = vmatprep.subr.mxu0 0.0
        %1242 = vmatpush2.msra.mxu0 0.0
        %1243 = vmatprep.subr.mxu0 0.0
        %1244 = vmatpush2.msra.mxu0 0.0
        %1245 = vmatprep.mubr.f32.mxu0 0.0
        %1246 = vmatmul.mubr.f32.gmra.mxu0 %v1179
        %v1247 = vpop.f32.mrf.mxu0
        %v1248 = vadd.f32 0.0, %v1247
        %v1249 = vpop.f32.mrf.mxu0
        %1250 = vdwg.mxu0
        %v1251 = vsel %vm745, %v1248, 0.0
        %v1252 = vrot.slane %v1251, 4
        %v1253 = vadd.f32 %v1251, %v1252
        %v1254 = vrot.slane %v1253, 2
        %v1255 = vadd.f32 %v1253, %v1254
        %v1256 = vrot.slane %v1255, 1
        %v1257 = vadd.f32 %v1255, %v1256
        %1258 = vrot.lane.b32.xlu0 %v744, 104
        %v1259 = vpop.permute.xlu0 %1258
        %1260 = vrot.lane.b32.xlu0 %v655, 104
        %v1261 = vpop.permute.xlu0 %1260
        %v1262 = vsel %vm745, %v1259, 0
        %v1264 = vsel %vm745, %v1261, 0
        %1266 = vmatprep.subr.mxu0 0.0
        %1267 = vmatpush1.xpose.msra.mxu0 0.0
        %1268 = vmatprep.subr.mxu0 0.0
        %1269 = vmatpush1.xpose.msra.mxu0 0.0
        %1270 = vmatprep.subr.mxu0 0.0
        %1271 = vmatpush1.xpose.msra.mxu0 0.0
        %1272 = vmatprep.subr.mxu0 0.0
        %1273 = vmatpush1.xpose.msra.mxu0 0.0
        %1274 = vmatprep.subr.mxu0 0.0
        %1275 = vmatpush1.xpose.msra.mxu0 0.0
        %1276 = vmatprep.subr.mxu0 0.0
        %1277 = vmatpush1.xpose.msra.mxu0 0.0
        %1278 = vmatprep.subr.mxu0 0.0
        %1279 = vmatpush1.xpose.msra.mxu0 0.0
        %1280 = vmatprep.subr.mxu0 0.0
        %1281 = vmatpush1.xpose.msra.mxu0 0.0
        %1282 = vmatprep.subr.mxu0 0.0
        %1283 = vmatpush1.xpose.msra.mxu0 0.0
        %1284 = vmatprep.subr.mxu0 0.0
        %1285 = vmatpush1.xpose.msra.mxu0 0.0
        %1286 = vmatprep.subr.mxu0 0.0
        %1287 = vmatpush1.xpose.msra.mxu0 0.0
        %1288 = vmatprep.subr.mxu0 0.0
        %1289 = vmatpush1.xpose.msra.mxu0 0.0
        %1290 = vmatprep.subr.mxu0 0.0
        %1291 = vmatpush1.xpose.msra.mxu0 0.0
        %1292 = vmatprep.subr.mxu0 0.0
        %1293 = vmatpush1.xpose.msra.mxu0 0.0
        %1294 = vmatprep.subr.mxu0 0.0
        %1295 = vmatpush1.xpose.msra.mxu0 0.0
        %1296 = vmatprep.subr.mxu0 0.0
        %1297 = vmatpush1.xpose.msra.mxu0 %v1264
        %1298 = vmatprep.subr.mxu0 0.0
        %1299 = vmatpush2.xpose.msra.mxu0 0.0
        %1300 = vmatprep.subr.mxu0 0.0
        %1301 = vmatpush2.xpose.msra.mxu0 0.0
        %1302 = vmatprep.subr.mxu0 0.0
        %1303 = vmatpush2.xpose.msra.mxu0 0.0
        %1304 = vmatprep.subr.mxu0 0.0
        %1305 = vmatpush2.xpose.msra.mxu0 0.0
        %1306 = vmatprep.subr.mxu0 0.0
        %1307 = vmatpush2.xpose.msra.mxu0 0.0
        %1308 = vmatprep.subr.mxu0 0.0
        %1309 = vmatpush2.xpose.msra.mxu0 0.0
        %1310 = vmatprep.subr.mxu0 0.0
        %1311 = vmatpush2.xpose.msra.mxu0 0.0
        %1312 = vmatprep.subr.mxu0 0.0
        %1313 = vmatpush2.xpose.msra.mxu0 0.0
        %1314 = vmatprep.subr.mxu0 0.0
        %1315 = vmatpush2.xpose.msra.mxu0 0.0
        %1316 = vmatprep.subr.mxu0 0.0
        %1317 = vmatpush2.xpose.msra.mxu0 0.0
        %1318 = vmatprep.subr.mxu0 0.0
        %1319 = vmatpush2.xpose.msra.mxu0 0.0
        %1320 = vmatprep.subr.mxu0 0.0
        %1321 = vmatpush2.xpose.msra.mxu0 0.0
        %1322 = vmatprep.subr.mxu0 0.0
        %1323 = vmatpush2.xpose.msra.mxu0 0.0
        %1324 = vmatprep.subr.mxu0 0.0
        %1325 = vmatpush2.xpose.msra.mxu0 0.0
        %1326 = vmatprep.subr.mxu0 0.0
        %1327 = vmatpush2.xpose.msra.mxu0 0.0
        %1328 = vmatprep.subr.mxu0 0.0
        %1329 = vmatpush2.xpose.msra.mxu0 0.0
        %1330 = vmatprep.mubr.f32.mxu0 0.0
        %1331 = vmatmul.mubr.f32.gmra.mxu0 %v1262
        %v1332 = vpop.f32.mrf.mxu0
        %v1333 = vadd.f32 0.0, %v1332
        %v1334 = vpop.f32.mrf.mxu0
        %1335 = vdwg.mxu0
        %v1336 = vsel %vm745, %v1333, -inf
        %1337 = vmax.xlane.f32.xlu0 %v1336
        %v1338 = vpop.xlane.xlu0 %1337
        %v1339 = vsub.f32 %v1333, %v1338
        %v1340 = vmul.f32 %v1339, 1.442695
        %v1341 = vpow.pop %v1340
        %v1342 = vsel %vm745, %v1341, 0.0
        %1343 = vadd.xlane.f32.xlu0 %v1342
        %v1344 = vpop.xlane.xlu0 %1343
        %v1345 = vrcp.pop %v1344
        %v1346 = vmul.f32 %v1341, %v1345
        %1347 = vrot.lane.b32.xlu0 %v741, 104
        %v1348 = vpop.permute.xlu0 %1347
        %v1351 = vsel %vm745, %v1346, 0
        %1353 = vmatprep.subr.mxu0 0.0
        %1354 = vmatpush1.msra.mxu0 0.0
        %1355 = vmatprep.subr.mxu0 0.0
        %1356 = vmatpush1.msra.mxu0 0.0
        %1357 = vmatprep.subr.mxu0 0.0
        %1358 = vmatpush1.msra.mxu0 0.0
        %1359 = vmatprep.subr.mxu0 0.0
        %1360 = vmatpush1.msra.mxu0 0.0
        %1361 = vmatprep.subr.mxu0 0.0
        %1362 = vmatpush1.msra.mxu0 0.0
        %1363 = vmatprep.subr.mxu0 0.0
        %1364 = vmatpush1.msra.mxu0 0.0
        %1365 = vmatprep.subr.mxu0 0.0
        %1366 = vmatpush1.msra.mxu0 0.0
        %1367 = vmatprep.subr.mxu0 0.0
        %1368 = vmatpush1.msra.mxu0 0.0
        %1369 = vmatprep.subr.mxu0 0.0
        %1370 = vmatpush1.msra.mxu0 0.0
        %1371 = vmatprep.subr.mxu0 0.0
        %1372 = vmatpush1.msra.mxu0 0.0
        %1373 = vmatprep.subr.mxu0 0.0
        %1374 = vmatpush1.msra.mxu0 0.0
        %1375 = vmatprep.subr.mxu0 0.0
        %1376 = vmatpush1.msra.mxu0 0.0
        %1377 = vmatprep.subr.mxu0 0.0
        %1378 = vmatpush1.msra.mxu0 0.0
        %1379 = vmatprep.subr.mxu0 0.0
        %1380 = vmatpush1.msra.mxu0 0.0
        %1381 = vmatprep.subr.mxu0 0.0
        %1382 = vmatpush1.msra.mxu0 0.0
        %1383 = vmatprep.subr.mxu0 0.0
        %1384 = vmatpush1.msra.mxu0 %v1348
        %1385 = vmatprep.subr.mxu0 0.0
        %1386 = vmatpush2.msra.mxu0 0.0
        %1387 = vmatprep.subr.mxu0 0.0
        %1388 = vmatpush2.msra.mxu0 0.0
        %1389 = vmatprep.subr.mxu0 0.0
        %1390 = vmatpush2.msra.mxu0 0.0
        %1391 = vmatprep.subr.mxu0 0.0
        %1392 = vmatpush2.msra.mxu0 0.0
        %1393 = vmatprep.subr.mxu0 0.0
        %1394 = vmatpush2.msra.mxu0 0.0
        %1395 = vmatprep.subr.mxu0 0.0
        %1396 = vmatpush2.msra.mxu0 0.0
        %1397 = vmatprep.subr.mxu0 0.0
        %1398 = vmatpush2.msra.mxu0 0.0
        %1399 = vmatprep.subr.mxu0 0.0
        %1400 = vmatpush2.msra.mxu0 0.0
        %1401 = vmatprep.subr.mxu0 0.0
        %1402 = vmatpush2.msra.mxu0 0.0
        %1403 = vmatprep.subr.mxu0 0.0
        %1404 = vmatpush2.msra.mxu0 0.0
        %1405 = vmatprep.subr.mxu0 0.0
        %1406 = vmatpush2.msra.mxu0 0.0
        %1407 = vmatprep.subr.mxu0 0.0
        %1408 = vmatpush2.msra.mxu0 0.0
        %1409 = vmatprep.subr.mxu0 0.0
        %1410 = vmatpush2.msra.mxu0 0.0
        %1411 = vmatprep.subr.mxu0 0.0
        %1412 = vmatpush2.msra.mxu0 0.0
        %1413 = vmatprep.subr.mxu0 0.0
        %1414 = vmatpush2.msra.mxu0 0.0
        %1415 = vmatprep.subr.mxu0 0.0
        %1416 = vmatpush2.msra.mxu0 0.0
        %1417 = vmatprep.mubr.f32.mxu0 0.0
        %1418 = vmatmul.mubr.f32.gmra.mxu0 %v1351
        %v1419 = vpop.f32.mrf.mxu0
        %v1420 = vadd.f32 0.0, %v1419
        %v1421 = vpop.f32.mrf.mxu0
        %1422 = vdwg.mxu0
        %v1423 = vsel %vm745, %v1420, 0.0
        %v1424 = vrot.slane %v1423, 4
        %v1425 = vadd.f32 %v1423, %v1424
        %v1426 = vrot.slane %v1425, 2
        %v1427 = vadd.f32 %v1425, %v1426
        %v1428 = vrot.slane %v1427, 1
        %v1429 = vadd.f32 %v1427, %v1428
        %1430 = vrot.lane.b32.xlu0 %v1001, 8
        %v1431 = vpop.permute.xlu0 %1430
        %1433 = vrot.lane.b32.xlu0 %v1174, 16
        %v1434 = vpop.permute.xlu0 %1433
        %1436 = vrot.lane.b32.xlu0 %v1346, 24
        %v1437 = vpop.permute.xlu0 %1436
        %v1439 = vsel %vm745, %v832, %v1431
        %v1440 = vsel %vm408, %v1439, %v1434
        %vm1441 = vcmask 195584
        %v1442 = vsel %vm1441, %v1440, %v1437
        %1443 = vst.msk [vmem:[%s396] sm:$0xff] %vm486, %v1442
        %1445 = vrot.lane.b32.xlu0 %v1085, 8
        %v1446 = vpop.permute.xlu0 %1445
        %1449 = vrot.lane.b32.xlu0 %v1257, 16
        %v1450 = vpop.permute.xlu0 %1449
        %1453 = vrot.lane.b32.xlu0 %v1429, 24
        %v1454 = vpop.permute.xlu0 %1453
        %v1456 = vsel %vm745, %v912, %v1446
        %v1457 = vsel %vm408, %v1456, %v1450
        %v1458 = vsel %vm1441, %v1457, %v1454
        %v1459 = vld [vmem:[%s5] sm:$0xff]
        %v1460 = vld [vmem:[%s5 + $0x8] sm:$0xff]
        %v1461 = vld [vmem:[%s5 + $0x10] sm:$0xff]
        %v1462 = vld [vmem:[%s5 + $0x18] sm:$0xff]
        %v1464 = vsel %vm486, %v1458, 0
        %v1467 = vsel %vm486, %v1459, 0
        %v1470 = vsel %vm486, %v1460, 0
        %v1473 = vsel %vm486, %v1461, 0
        %v1476 = vsel %vm486, %v1462, 0
        %1478 = vmatprep.subr.mxu0 0.0
        %1479 = vmatpush1.xpose.msra.mxu0 0.0
        %1480 = vmatprep.subr.mxu0 0.0
        %1481 = vmatpush1.xpose.msra.mxu0 0.0
        %1482 = vmatprep.subr.mxu0 0.0
        %1483 = vmatpush1.xpose.msra.mxu0 0.0
        %1484 = vmatprep.subr.mxu0 0.0
        %1485 = vmatpush1.xpose.msra.mxu0 0.0
        %1486 = vmatprep.subr.mxu0 0.0
        %1487 = vmatpush1.xpose.msra.mxu0 0.0
        %1488 = vmatprep.subr.mxu0 0.0
        %1489 = vmatpush1.xpose.msra.mxu0 0.0
        %1490 = vmatprep.subr.mxu0 0.0
        %1491 = vmatpush1.xpose.msra.mxu0 0.0
        %1492 = vmatprep.subr.mxu0 0.0
        %1493 = vmatpush1.xpose.msra.mxu0 0.0
        %1494 = vmatprep.subr.mxu0 0.0
        %1495 = vmatpush1.xpose.msra.mxu0 0.0
        %1496 = vmatprep.subr.mxu0 0.0
        %1497 = vmatpush1.xpose.msra.mxu0 0.0
        %1498 = vmatprep.subr.mxu0 0.0
        %1499 = vmatpush1.xpose.msra.mxu0 0.0
        %1500 = vmatprep.subr.mxu0 0.0
        %1501 = vmatpush1.xpose.msra.mxu0 0.0
        %1502 = vmatprep.subr.mxu0 0.0
        %1503 = vmatpush1.xpose.msra.mxu0 %v1476
        %1504 = vmatprep.subr.mxu0 0.0
        %1505 = vmatpush1.xpose.msra.mxu0 %v1473
        %1506 = vmatprep.subr.mxu0 0.0
        %1507 = vmatpush1.xpose.msra.mxu0 %v1470
        %1508 = vmatprep.subr.mxu0 0.0
        %1509 = vmatpush1.xpose.msra.mxu0 %v1467
        %1510 = vmatprep.subr.mxu0 0.0
        %1511 = vmatpush2.xpose.msra.mxu0 0.0
        %1512 = vmatprep.subr.mxu0 0.0
        %1513 = vmatpush2.xpose.msra.mxu0 0.0
        %1514 = vmatprep.subr.mxu0 0.0
        %1515 = vmatpush2.xpose.msra.mxu0 0.0
        %1516 = vmatprep.subr.mxu0 0.0
        %1517 = vmatpush2.xpose.msra.mxu0 0.0
        %1518 = vmatprep.subr.mxu0 0.0
        %1519 = vmatpush2.xpose.msra.mxu0 0.0
        %1520 = vmatprep.subr.mxu0 0.0
        %1521 = vmatpush2.xpose.msra.mxu0 0.0
        %1522 = vmatprep.subr.mxu0 0.0
        %1523 = vmatpush2.xpose.msra.mxu0 0.0
        %1524 = vmatprep.subr.mxu0 0.0
        %1525 = vmatpush2.xpose.msra.mxu0 0.0
        %1526 = vmatprep.subr.mxu0 0.0
        %1527 = vmatpush2.xpose.msra.mxu0 0.0
        %1528 = vmatprep.subr.mxu0 0.0
        %1529 = vmatpush2.xpose.msra.mxu0 0.0
        %1530 = vmatprep.subr.mxu0 0.0
        %1531 = vmatpush2.xpose.msra.mxu0 0.0
        %1532 = vmatprep.subr.mxu0 0.0
        %1533 = vmatpush2.xpose.msra.mxu0 0.0
        %1534 = vmatprep.subr.mxu0 0.0
        %1535 = vmatpush2.xpose.msra.mxu0 0.0
        %1536 = vmatprep.subr.mxu0 0.0
        %1537 = vmatpush2.xpose.msra.mxu0 0.0
        %1538 = vmatprep.subr.mxu0 0.0
        %1539 = vmatpush2.xpose.msra.mxu0 0.0
        %1540 = vmatprep.subr.mxu0 0.0
        %1541 = vmatpush2.xpose.msra.mxu0 0.0
        %1542 = vmatprep.mubr.f32.mxu0 0.0
        %1543 = vmatmul.mubr.f32.gmra.mxu0 %v1464
        %v1544 = vpop.f32.mrf.mxu0
        %v1545 = vadd.f32 0.0, %v1544
        %v1546 = vpop.f32.mrf.mxu0
        %1547 = vdwg.mxu0
        %vm1548 = vcmask 253952
        %v1549 = vsel %vm1548, %v1545, 0.0
        %1550 = vadd.xlane.f32.xlu0 %v1549
        %v1551 = vpop.xlane.xlu0 %1550
        %v1552 = vrcp.pop 32.0
        %v1553 = vmul.f32 %v1551, %v1552
        %v1554 = vsub.f32 %v1545, %v1553
        %v1555 = vmul.f32 %v1554, %v1554
        %v1556 = vsel %vm1548, %v1555, 0.0
        %1557 = vadd.xlane.f32.xlu0 %v1556
        %v1558 = vpop.xlane.xlu0 %1557
        %v1559 = vmul.f32 %v1558, %v1552
        %v1560 = vadd.f32 %v1559, 1e-06
        %v1561 = vrsqrt.pop %v1560
        %v1562 = vmul.f32 %v1554, %v1561
        %v1563 = vld [vmem:[%s6] sm:$0x1]
        %v1564 = vmul.f32 %v1562, %v1563
        %v1565 = vld [vmem:[%s7] sm:$0x1]
        %v1566 = vadd.f32 %v1564, %v1565
        %1567 = vst.msk [vmem:[%s382] sm:$0x1] %vm1548, %v1566
        %s1568 = sand.u32 %s208, 1
        %s1569 = scalar_lea.sflag [#allocation4], %s1568
        %s1570 = sand.u32 %s208, 1
        %s1571 = scalar_lea.vmem [#allocation10], %s1570
        %p1572 = scmp.lt.s32.totalorder %s27, 1
        %s1573 = scalar_select %p1572, %s27, 1
        %s1574 = smul.addr %s1573, 8
        %s1575 = scalar_lea.vmem %s9, %s1574
        // Predicated region
        $region69: #{tag_self_attention_forward.1} parent=51 // pred_check
          %p1576 = pneg %p218
        $region70: #{tag_self_attention_forward.1} parent=51 // pred_check_branch
          %1578 = sbr.rel (%p1576) target = $region72
        $region71: #{tag_self_attention_forward.1} parent=51 // pred_region
          %s1580 = ssub.s32 16, 16
          %1581 = vsyncadd %s1569, %s1580
          %s1582 = smul.addr %s27, 16
          %s1583 = scalar_lea.hbm %s8, %s1582
          %s1585 = sshll.u32 %s1571, 4
          %s1586 = int_to_ptr.vmem [resolvable:$true] %s1585
          %1588 = dma.vmem_to_hbm [thread:$0]  %s1586, 16, %s1583, %s1569
        $region72: #{tag_self_attention_forward.1} parent=51 // pred_fallthru
          _
        // Predicated region
        $region73: #{tag_self_attention_forward.1} parent=51 // pred_check
          %p1589 = pneg %p244
        $region74: #{tag_self_attention_forward.1} parent=51 // pred_check_branch
          %1591 = sbr.rel (%p1589) target = $region76
        $region75: #{tag_self_attention_forward.1} parent=51 // pred_region
          _
        $region76: #{tag_self_attention_forward.1} parent=51 // pred_fallthru
          _
      $region52: #{tag_self_attention_forward.1} parent=5 // pred_fallthru
        _
      %p1592 = scmp.le.s32.totalorder 2, %s22
      // Predicated region
      $region77: #{tag_self_attention_forward.1} parent=5 // pred_check
        %p1593 = pneg %p1592
      $region78: #{tag_self_attention_forward.1} parent=5 // pred_check_branch
        %1595 = sbr.rel (%p1593) target = $region80
      $region79: #{tag_self_attention_forward.1} parent=5 // pred_region
        %s1596 = ssub.s32 %s22, 2
        // Predicated region
        $region81: #{tag_self_attention_forward.1} parent=79 // pred_check
          %p1597 = pneg %p224
        $region82: #{tag_self_attention_forward.1} parent=79 // pred_check_branch
          %1599 = sbr.rel (%p1597) target = $region84
        $region83: #{tag_self_attention_forward.1} parent=79 // pred_region
          %s1600 = sand.u32 %s209, 1
          %s1601 = scalar_lea.sflag [#allocation4], %s1600
          %s1602 = sand.u32 %s209, 1
          %s1603 = scalar_lea.vmem [#allocation10], %s1602
          %1604 = dma.done %s1601, 16
        $region84: #{tag_self_attention_forward.1} parent=79 // pred_fallthru
          _
        // Predicated region
        $region85: #{tag_self_attention_forward.1} parent=79 // pred_check
          %p1605 = pneg %p250
        $region86: #{tag_self_attention_forward.1} parent=79 // pred_check_branch
          %1607 = sbr.rel (%p1605) target = $region88
        $region87: #{tag_self_attention_forward.1} parent=79 // pred_region
          %p1608 = scmp.lt.s32.totalorder %s28, 1
          %s1609 = scalar_select %p1608, %s28, 1
          %s1610 = smul.addr %s1609, 8
          %s1611 = scalar_lea.vmem %s9, %s1610
        $region88: #{tag_self_attention_forward.1} parent=79 // pred_fallthru
          _
      $region80: #{tag_self_attention_forward.1} parent=5 // pred_fallthru
        _
    $region6: #{tag_self_attention_forward.1} parent=1 // loop_footer
      %s26 = sadd.s32 1, %s22
    $region7: #{tag_self_attention_forward.1} parent=1 // loop_footer_branch
      %21 = sbr.rel target = $region3
    $region8: #{tag_self_attention_forward.1} parent=1 // loop_exit
      _
    %1612 = vsyncpa [#allocation3], 1
    %s1613 = scalar_lea.sflag [#allocation3], 1
    %1614 = vsyncpa %s1613, 1
    %1615 = vsyncpa [#allocation6], 1
    %1616 = vsyncpa [#allocation9], 1
    %1617 = vsyncpa [#allocation4], 1
    %s1618 = scalar_lea.sflag [#allocation4], 1
    %1619 = vsyncpa %s1618, 1

</llo_original>
